<compile_context>
chip_gen: v7x
topology: tpu7x:2x2x1
jax: 0.10.0
libtpu: 0.0.40
codegen_flags: <defaults>
</compile_context>

<pallas_src>
import jax
import jax.numpy as jnp
from jax.experimental import pallas as pl
from jax.experimental.pallas import tpu as pltpu


def _lstm_kernel(x_ref, w_ref, b_ref, out_ref, hfin_ref, cfin_ref):
    """One grid step == one batch tile; the full time recurrence runs in-body.

    x_ref   : (Bt, T, D)  f32   batch-major input tile (VMEM resident)
    w_ref   : (D, 4D)     bf16  stacked weights [W1^T | W2^T | W4^T | W3^T]
    b_ref   : (1, 4D)     f32   stacked biases  (b_i + extra_bias), same order
    out_ref : (Bt, T, D)  f32   per-step outputs (written in VMEM, one HBM writeback)
    hfin_ref: (Bt, D)     f32   final hiddenDown (h)
    cfin_ref: (Bt, D)     f32   final hiddenUp   (cell)
    """
    Bt, T, D = x_ref.shape

    w = w_ref[...]                       # bf16, stays resident for all T steps
    bias = b_ref[...]                    # f32 (1, 4D)

    h = jnp.zeros((Bt, D), jnp.float32)
    c = jnp.zeros((Bt, D), jnp.float32)

    # Fully-unrolled static time loop (T is small & known at trace time): no
    # per-step grid overhead, full scheduler visibility across steps.
    for t in range(T):
        s = h + x_ref[:, t, :]                                   # (Bt, D) f32
        # bf16 MXU operands, f32 accumulation; bias added in f32.
        z = jnp.dot(s.astype(jnp.bfloat16), w,
                    preferred_element_type=jnp.float32) + bias   # (Bt, 4D) f32

        # Gate layout: [forget | input_sig | output_sig | input_tanh]
        sig = jax.nn.sigmoid(z[:, 0:3 * D])                      # one wide EUP launch
        th = jnp.tanh(z[:, 3 * D:4 * D])

        c = c * sig[:, 0:D] + sig[:, D:2 * D] * th               # cell update
        o = sig[:, 2 * D:3 * D] * jnp.tanh(c)                    # output gate
        h = o

        out_ref[:, t, :] = o.astype(out_ref.dtype)               # VMEM store only

    hfin_ref[...] = h.astype(hfin_ref.dtype)
    cfin_ref[...] = c.astype(cfin_ref.dtype)


def my_lstm_forward(x, w_stack, b_stack, *, batch_tile=None):
    """x: (B, T, D) batch_first f32. w_stack: (D, 4D) bf16. b_stack: (1, 4D) f32.

    Returns (resultEmbs (B,T,D), (hiddenUp (B,1,D), hiddenDown (B,1,D))).
    """
    B, T, D = x.shape
    assert w_stack.shape == (D, 4 * D) and b_stack.shape == (1, 4 * D)

    if batch_tile is None:
        # Split the batch across the two v7x TensorCores when there is enough
        # work; each tile must keep the sublane granularity (multiple of 8).
        batch_tile = B // 2 if (B >= 16 and (B // 2) % 8 == 0) else B
    assert B % batch_tile == 0
    assert batch_tile == B or batch_tile % 8 == 0, "batch tile must be full B or a multiple of 8"

    grid = (B // batch_tile,)

    out, h_fin, c_fin = pl.pallas_call(
        _lstm_kernel,
        out_shape=(
            jax.ShapeDtypeStruct((B, T, D), x.dtype),   # per-step outputs (batch-major)
            jax.ShapeDtypeStruct((B, D), x.dtype),      # final hiddenDown (h)
            jax.ShapeDtypeStruct((B, D), x.dtype),      # final hiddenUp (cell)
        ),
        grid=grid,
        in_specs=[
            pl.BlockSpec((batch_tile, T, D), lambda b: (b, 0, 0)),   # x tile
            pl.BlockSpec((D, 4 * D), lambda b: (0, 0)),              # weights (resident)
            pl.BlockSpec((1, 4 * D), lambda b: (0, 0)),              # biases  (resident)
        ],
        out_specs=[
            pl.BlockSpec((batch_tile, T, D), lambda b: (b, 0, 0)),
            pl.BlockSpec((batch_tile, D), lambda b: (b, 0)),
            pl.BlockSpec((batch_tile, D), lambda b: (b, 0)),
        ],
        compiler_params=pltpu.CompilerParams(
            # Batch tiles are independent -> shard across TensorCores (v7x).
            dimension_semantics=("parallel",),
        ),
    )(x, w_stack, b_stack)

    return out, (c_fin[:, None, :], h_fin[:, None, :])     # (hiddenUp, hiddenDown)


def init_params(key, input_size, hidden_dim):
    """Deterministic parameter init mirroring the module's __init__ shapes.

    Weights are stacked in gate order [W1 | W2 | W4 | W3] (sigmoid gates first)
    and stored as bf16 for the MXU; biases stay f32.
    """
    assert input_size == hidden_dim, "module requires inputSize == hiddenDim"
    D = input_size
    keys = jax.random.split(key, 9)
    bound = 1.0 / jnp.sqrt(D)
    # nn.Linear weights: (out, in); we store each already transposed for s @ W^T.
    W = [jax.random.uniform(keys[i], (D, D), jnp.float32, -bound, bound) for i in range(4)]
    b = [jax.random.uniform(keys[4 + i], (D,), jnp.float32, -bound, bound) for i in range(4)]
    extra_bias = jax.random.normal(keys[8], (1, D), jnp.float32)   # nn.Parameter (1, hiddenDim)

    gate_order = (0, 1, 3, 2)   # [W1 | W2 | W4 | W3] -> sigmoid on z[:, :3D], tanh on z[:, 3D:]
    w_stack = jnp.concatenate([W[i].T for i in gate_order], axis=1).astype(jnp.bfloat16)  # (D, 4D)
    b_stack = jnp.concatenate([(b[i][None, :] + extra_bias) for i in gate_order], axis=1) # (1, 4D) f32
    return w_stack, b_stack, W, b, extra_bias


def reference_forward(x, W, b, extra_bias, *, matmul_dtype=jnp.float32):
    """Pure-JAX reference matching the PyTorch forward (batch_first=True).

    matmul_dtype=bf16 reproduces the kernel's MXU rounding (f32 accumulation)
    for a tight numeric check; f32 gives the exact PyTorch-style math.
    """
    B, T, D = x.shape
    h = jnp.zeros((B, D), jnp.float32)
    c = jnp.zeros((B, D), jnp.float32)

    def mm(s, Wi):
        return jnp.dot(s.astype(matmul_dtype), Wi.T.astype(matmul_dtype),
                       preferred_element_type=jnp.float32)

    outs = []
    for t in range(T):
        s = h + x[:, t, :]
        f = jax.nn.sigmoid(mm(s, W[0]) + b[0] + extra_bias)
        ig = jax.nn.sigmoid(mm(s, W[1]) + b[1] + extra_bias) * jnp.tanh(mm(s, W[2]) + b[2] + extra_bias)
        c = c * f + ig
        o = jax.nn.sigmoid(mm(s, W[3]) + b[3] + extra_bias) * jnp.tanh(c)
        h = o
        outs.append(h)
    out = jnp.stack(outs, axis=1)
    return out, (c[:, None, :], h[:, None, :])


if __name__ == "__main__":
    B, T, D = 8, 8, 128   # batch, seq, inputSize == hiddenDim
    key = jax.random.PRNGKey(0)
    kx, kp = jax.random.split(key)
    x = jax.random.normal(kx, (B, T, D), jnp.float32)

    w_stack, b_stack, W, b, extra_bias = init_params(kp, D, D)

    out, (h_up, h_down) = jax.jit(my_lstm_forward)(x, w_stack, b_stack)
    jax.block_until_ready(out)
    jax.block_until_ready(h_up)
    jax.block_until_ready(h_down)

    # 1) Tight check against a reference that uses the same bf16-operand matmul.
    ref_out, (ref_up, ref_down) = reference_forward(x, W, b, extra_bias, matmul_dtype=jnp.bfloat16)
    assert jnp.allclose(out, ref_out, atol=1e-3, rtol=1e-3)
    assert jnp.allclose(h_up, ref_up, atol=1e-3, rtol=1e-3)
    assert jnp.allclose(h_down, ref_down, atol=1e-3, rtol=1e-3)

    # 2) Sanity bound against the pure-f32 PyTorch-equivalent math (bf16 weight drift).
    f32_out, (f32_up, f32_down) = reference_forward(x, W, b, extra_bias, matmul_dtype=jnp.float32)
    assert jnp.allclose(out, f32_out, atol=5e-2, rtol=5e-2)
    assert jnp.allclose(h_up, f32_up, atol=5e-2, rtol=5e-2)
    assert jnp.allclose(h_down, f32_down, atol=5e-2, rtol=5e-2)

    print("KERNEL_OK")
</pallas_src>

<mosaic_0001>
module attributes {stable_mosaic.version = 11 : i64} {
  func.func @_lstm_kernel(%arg0: i32, %arg1: memref<8x8x128xf32, #tpu.memory_space<vmem>>, %arg2: memref<128x512xbf16, #tpu.memory_space<vmem>>, %arg3: memref<1x512xf32, #tpu.memory_space<vmem>>, %arg4: memref<8x8x128xf32, #tpu.memory_space<vmem>>, %arg5: memref<8x128xf32, #tpu.memory_space<vmem>>, %arg6: memref<8x128xf32, #tpu.memory_space<vmem>>) attributes {dimension_semantics = [#tpu.dimension_semantics<parallel>], iteration_bounds = array<i64: 1>, scalar_prefetch = 0 : i64, scratch_operands = 0 : i64, tpu.core_type = #tpu.core_type<tc>, window_params = [{transform_indices = @transform_0, window_bounds = array<i64: 8, 8, 128>}, {pipeline_mode = #tpu.pipeline_mode<synchronous>, transform_indices = @transform_1, window_bounds = array<i64: 128, 512>}, {pipeline_mode = #tpu.pipeline_mode<synchronous>, transform_indices = @transform_2, window_bounds = array<i64: 1, 512>}, {transform_indices = @transform_3, window_bounds = array<i64: 8, 8, 128>}, {transform_indices = @transform_4, window_bounds = array<i64: 8, 128>}, {transform_indices = @transform_5, window_bounds = array<i64: 8, 128>}]} {
    %c0 = arith.constant 0 : index
    %c0_0 = arith.constant 0 : index
    %0 = vector.load %arg2[%c0, %c0_0] : memref<128x512xbf16, #tpu.memory_space<vmem>>, vector<128x512xbf16>
    %c0_1 = arith.constant 0 : index
    %c0_2 = arith.constant 0 : index
    %1 = vector.load %arg3[%c0_1, %c0_2] : memref<1x512xf32, #tpu.memory_space<vmem>>, vector<1x512xf32>
    %cst = arith.constant 0.000000e+00 : f32
    %2 = vector.broadcast %cst : f32 to vector<8x128xf32>
    %cst_3 = arith.constant 0.000000e+00 : f32
    %3 = vector.broadcast %cst_3 : f32 to vector<8x128xf32>
    %c0_4 = arith.constant 0 : index
    %c0_5 = arith.constant 0 : index
    %c0_6 = arith.constant 0 : index
    %4 = vector.load %arg1[%c0_4, %c0_5, %c0_6] : memref<8x8x128xf32, #tpu.memory_space<vmem>>, vector<8x1x128xf32>
    %5 = vector.shape_cast %4 : vector<8x1x128xf32> to vector<8x128xf32>
    %6 = arith.addf %2, %5 : vector<8x128xf32>
    %7 = arith.truncf %6 : vector<8x128xf32> to vector<8x128xbf16>
    %cst_7 = arith.constant dense<0.000000e+00> : vector<8x512xf32>
    %8 = tpu.matmul %7, %0, %cst_7 {dimension_numbers = #tpu.dot_dimension_numbers<[1], [0], [0], [1], [0, 0, 1, 1], [], []>} : vector<8x128xbf16>, vector<128x512xbf16>, vector<8x512xf32> -> vector<8x512xf32>
    %9 = vector.broadcast %1 : vector<1x512xf32> to vector<8x512xf32>
    %10 = arith.addf %8, %9 : vector<8x512xf32>
    %11 = vector.extract_strided_slice %10 {offsets = [0, 0], sizes = [8, 384], strides = [1, 1]} : vector<8x512xf32> to vector<8x384xf32>
    %12 = arith.negf %11 : vector<8x384xf32>
    %13 = math.exp %12 : vector<8x384xf32>
    %cst_8 = arith.constant 1.000000e+00 : f32
    %14 = vector.broadcast %cst_8 : f32 to vector<8x384xf32>
    %15 = arith.addf %14, %13 : vector<8x384xf32>
    %16 = arith.divf %14, %15 : vector<8x384xf32>
    %17 = vector.extract_strided_slice %10 {offsets = [0, 384], sizes = [8, 128], strides = [1, 1]} : vector<8x512xf32> to vector<8x128xf32>
    %18 = math.tanh %17 : vector<8x128xf32>
    %19 = vector.extract_strided_slice %16 {offsets = [0, 0], sizes = [8, 128], strides = [1, 1]} : vector<8x384xf32> to vector<8x128xf32>
    %20 = arith.mulf %3, %19 : vector<8x128xf32>
    %21 = vector.extract_strided_slice %16 {offsets = [0, 128], sizes = [8, 128], strides = [1, 1]} : vector<8x384xf32> to vector<8x128xf32>
    %22 = arith.mulf %21, %18 : vector<8x128xf32>
    %23 = arith.addf %20, %22 : vector<8x128xf32>
    %24 = vector.extract_strided_slice %16 {offsets = [0, 256], sizes = [8, 128], strides = [1, 1]} : vector<8x384xf32> to vector<8x128xf32>
    %25 = math.tanh %23 : vector<8x128xf32>
    %26 = arith.mulf %24, %25 : vector<8x128xf32>
    %c0_9 = arith.constant 0 : index
    %c0_10 = arith.constant 0 : index
    %c0_11 = arith.constant 0 : index
    %27 = vector.load %arg4[%c0_9, %c0_10, %c0_11] : memref<8x8x128xf32, #tpu.memory_space<vmem>>, vector<8x1x128xf32>
    %28 = vector.shape_cast %27 : vector<8x1x128xf32> to vector<8x128xf32>
    %29 = vector.shape_cast %26 : vector<8x128xf32> to vector<8x1x128xf32>
    tpu.vector_store %arg4[%c0_9, %c0_10, %c0_11], %29 {strides = array<i32>} : memref<8x8x128xf32, #tpu.memory_space<vmem>>, vector<8x1x128xf32>,
    %c0_12 = arith.constant 0 : index
    %c1 = arith.constant 1 : index
    %c0_13 = arith.constant 0 : index
    %30 = vector.load %arg1[%c0_12, %c1, %c0_13] : memref<8x8x128xf32, #tpu.memory_space<vmem>>, vector<8x1x128xf32>
    %31 = vector.shape_cast %30 : vector<8x1x128xf32> to vector<8x128xf32>
    %32 = arith.addf %26, %31 : vector<8x128xf32>
    %33 = arith.truncf %32 : vector<8x128xf32> to vector<8x128xbf16>
    %cst_14 = arith.constant dense<0.000000e+00> : vector<8x512xf32>
    %34 = tpu.matmul %33, %0, %cst_14 {dimension_numbers = #tpu.dot_dimension_numbers<[1], [0], [0], [1], [0, 0, 1, 1], [], []>} : vector<8x128xbf16>, vector<128x512xbf16>, vector<8x512xf32> -> vector<8x512xf32>
    %35 = vector.broadcast %1 : vector<1x512xf32> to vector<8x512xf32>
    %36 = arith.addf %34, %35 : vector<8x512xf32>
    %37 = vector.extract_strided_slice %36 {offsets = [0, 0], sizes = [8, 384], strides = [1, 1]} : vector<8x512xf32> to vector<8x384xf32>
    %38 = arith.negf %37 : vector<8x384xf32>
    %39 = math.exp %38 : vector<8x384xf32>
    %cst_15 = arith.constant 1.000000e+00 : f32
    %40 = vector.broadcast %cst_15 : f32 to vector<8x384xf32>
    %41 = arith.addf %40, %39 : vector<8x384xf32>
    %42 = arith.divf %40, %41 : vector<8x384xf32>
    %43 = vector.extract_strided_slice %36 {offsets = [0, 384], sizes = [8, 128], strides = [1, 1]} : vector<8x512xf32> to vector<8x128xf32>
    %44 = math.tanh %43 : vector<8x128xf32>
    %45 = vector.extract_strided_slice %42 {offsets = [0, 0], sizes = [8, 128], strides = [1, 1]} : vector<8x384xf32> to vector<8x128xf32>
    %46 = arith.mulf %23, %45 : vector<8x128xf32>
    %47 = vector.extract_strided_slice %42 {offsets = [0, 128], sizes = [8, 128], strides = [1, 1]} : vector<8x384xf32> to vector<8x128xf32>
    %48 = arith.mulf %47, %44 : vector<8x128xf32>
    %49 = arith.addf %46, %48 : vector<8x128xf32>
    %50 = vector.extract_strided_slice %42 {offsets = [0, 256], sizes = [8, 128], strides = [1, 1]} : vector<8x384xf32> to vector<8x128xf32>
    %51 = math.tanh %49 : vector<8x128xf32>
    %52 = arith.mulf %50, %51 : vector<8x128xf32>
    %c0_16 = arith.constant 0 : index
    %c1_17 = arith.constant 1 : index
    %c0_18 = arith.constant 0 : index
    %53 = vector.load %arg4[%c0_16, %c1_17, %c0_18] : memref<8x8x128xf32, #tpu.memory_space<vmem>>, vector<8x1x128xf32>
    %54 = vector.shape_cast %53 : vector<8x1x128xf32> to vector<8x128xf32>
    %55 = vector.shape_cast %52 : vector<8x128xf32> to vector<8x1x128xf32>
    tpu.vector_store %arg4[%c0_16, %c1_17, %c0_18], %55 {strides = array<i32>} : memref<8x8x128xf32, #tpu.memory_space<vmem>>, vector<8x1x128xf32>,
    %c0_19 = arith.constant 0 : index
    %c2 = arith.constant 2 : index
    %c0_20 = arith.constant 0 : index
    %56 = vector.load %arg1[%c0_19, %c2, %c0_20] : memref<8x8x128xf32, #tpu.memory_space<vmem>>, vector<8x1x128xf32>
    %57 = vector.shape_cast %56 : vector<8x1x128xf32> to vector<8x128xf32>
    %58 = arith.addf %52, %57 : vector<8x128xf32>
    %59 = arith.truncf %58 : vector<8x128xf32> to vector<8x128xbf16>
    %cst_21 = arith.constant dense<0.000000e+00> : vector<8x512xf32>
    %60 = tpu.matmul %59, %0, %cst_21 {dimension_numbers = #tpu.dot_dimension_numbers<[1], [0], [0], [1], [0, 0, 1, 1], [], []>} : vector<8x128xbf16>, vector<128x512xbf16>, vector<8x512xf32> -> vector<8x512xf32>
    %61 = vector.broadcast %1 : vector<1x512xf32> to vector<8x512xf32>
    %62 = arith.addf %60, %61 : vector<8x512xf32>
    %63 = vector.extract_strided_slice %62 {offsets = [0, 0], sizes = [8, 384], strides = [1, 1]} : vector<8x512xf32> to vector<8x384xf32>
    %64 = arith.negf %63 : vector<8x384xf32>
    %65 = math.exp %64 : vector<8x384xf32>
    %cst_22 = arith.constant 1.000000e+00 : f32
    %66 = vector.broadcast %cst_22 : f32 to vector<8x384xf32>
    %67 = arith.addf %66, %65 : vector<8x384xf32>
    %68 = arith.divf %66, %67 : vector<8x384xf32>
    %69 = vector.extract_strided_slice %62 {offsets = [0, 384], sizes = [8, 128], strides = [1, 1]} : vector<8x512xf32> to vector<8x128xf32>
    %70 = math.tanh %69 : vector<8x128xf32>
    %71 = vector.extract_strided_slice %68 {offsets = [0, 0], sizes = [8, 128], strides = [1, 1]} : vector<8x384xf32> to vector<8x128xf32>
    %72 = arith.mulf %49, %71 : vector<8x128xf32>
    %73 = vector.extract_strided_slice %68 {offsets = [0, 128], sizes = [8, 128], strides = [1, 1]} : vector<8x384xf32> to vector<8x128xf32>
    %74 = arith.mulf %73, %70 : vector<8x128xf32>
    %75 = arith.addf %72, %74 : vector<8x128xf32>
    %76 = vector.extract_strided_slice %68 {offsets = [0, 256], sizes = [8, 128], strides = [1, 1]} : vector<8x384xf32> to vector<8x128xf32>
    %77 = math.tanh %75 : vector<8x128xf32>
    %78 = arith.mulf %76, %77 : vector<8x128xf32>
    %c0_23 = arith.constant 0 : index
    %c2_24 = arith.constant 2 : index
    %c0_25 = arith.constant 0 : index
    %79 = vector.load %arg4[%c0_23, %c2_24, %c0_25] : memref<8x8x128xf32, #tpu.memory_space<vmem>>, vector<8x1x128xf32>
    %80 = vector.shape_cast %79 : vector<8x1x128xf32> to vector<8x128xf32>
    %81 = vector.shape_cast %78 : vector<8x128xf32> to vector<8x1x128xf32>
    tpu.vector_store %arg4[%c0_23, %c2_24, %c0_25], %81 {strides = array<i32>} : memref<8x8x128xf32, #tpu.memory_space<vmem>>, vector<8x1x128xf32>,
    %c0_26 = arith.constant 0 : index
    %c3 = arith.constant 3 : index
    %c0_27 = arith.constant 0 : index
    %82 = vector.load %arg1[%c0_26, %c3, %c0_27] : memref<8x8x128xf32, #tpu.memory_space<vmem>>, vector<8x1x128xf32>
    %83 = vector.shape_cast %82 : vector<8x1x128xf32> to vector<8x128xf32>
    %84 = arith.addf %78, %83 : vector<8x128xf32>
    %85 = arith.truncf %84 : vector<8x128xf32> to vector<8x128xbf16>
    %cst_28 = arith.constant dense<0.000000e+00> : vector<8x512xf32>
    %86 = tpu.matmul %85, %0, %cst_28 {dimension_numbers = #tpu.dot_dimension_numbers<[1], [0], [0], [1], [0, 0, 1, 1], [], []>} : vector<8x128xbf16>, vector<128x512xbf16>, vector<8x512xf32> -> vector<8x512xf32>
    %87 = vector.broadcast %1 : vector<1x512xf32> to vector<8x512xf32>
    %88 = arith.addf %86, %87 : vector<8x512xf32>
    %89 = vector.extract_strided_slice %88 {offsets = [0, 0], sizes = [8, 384], strides = [1, 1]} : vector<8x512xf32> to vector<8x384xf32>
    %90 = arith.negf %89 : vector<8x384xf32>
    %91 = math.exp %90 : vector<8x384xf32>
    %cst_29 = arith.constant 1.000000e+00 : f32
    %92 = vector.broadcast %cst_29 : f32 to vector<8x384xf32>
    %93 = arith.addf %92, %91 : vector<8x384xf32>
    %94 = arith.divf %92, %93 : vector<8x384xf32>
    %95 = vector.extract_strided_slice %88 {offsets = [0, 384], sizes = [8, 128], strides = [1, 1]} : vector<8x512xf32> to vector<8x128xf32>
    %96 = math.tanh %95 : vector<8x128xf32>
    %97 = vector.extract_strided_slice %94 {offsets = [0, 0], sizes = [8, 128], strides = [1, 1]} : vector<8x384xf32> to vector<8x128xf32>
    %98 = arith.mulf %75, %97 : vector<8x128xf32>
    %99 = vector.extract_strided_slice %94 {offsets = [0, 128], sizes = [8, 128], strides = [1, 1]} : vector<8x384xf32> to vector<8x128xf32>
    %100 = arith.mulf %99, %96 : vector<8x128xf32>
    %101 = arith.addf %98, %100 : vector<8x128xf32>
    %102 = vector.extract_strided_slice %94 {offsets = [0, 256], sizes = [8, 128], strides = [1, 1]} : vector<8x384xf32> to vector<8x128xf32>
    %103 = math.tanh %101 : vector<8x128xf32>
    %104 = arith.mulf %102, %103 : vector<8x128xf32>
    %c0_30 = arith.constant 0 : index
    %c3_31 = arith.constant 3 : index
    %c0_32 = arith.constant 0 : index
    %105 = vector.load %arg4[%c0_30, %c3_31, %c0_32] : memref<8x8x128xf32, #tpu.memory_space<vmem>>, vector<8x1x128xf32>
    %106 = vector.shape_cast %105 : vector<8x1x128xf32> to vector<8x128xf32>
    %107 = vector.shape_cast %104 : vector<8x128xf32> to vector<8x1x128xf32>
    tpu.vector_store %arg4[%c0_30, %c3_31, %c0_32], %107 {strides = array<i32>} : memref<8x8x128xf32, #tpu.memory_space<vmem>>, vector<8x1x128xf32>,
    %c0_33 = arith.constant 0 : index
    %c4 = arith.constant 4 : index
    %c0_34 = arith.constant 0 : index
    %108 = vector.load %arg1[%c0_33, %c4, %c0_34] : memref<8x8x128xf32, #tpu.memory_space<vmem>>, vector<8x1x128xf32>
    %109 = vector.shape_cast %108 : vector<8x1x128xf32> to vector<8x128xf32>
    %110 = arith.addf %104, %109 : vector<8x128xf32>
    %111 = arith.truncf %110 : vector<8x128xf32> to vector<8x128xbf16>
    %cst_35 = arith.constant dense<0.000000e+00> : vector<8x512xf32>
    %112 = tpu.matmul %111, %0, %cst_35 {dimension_numbers = #tpu.dot_dimension_numbers<[1], [0], [0], [1], [0, 0, 1, 1], [], []>} : vector<8x128xbf16>, vector<128x512xbf16>, vector<8x512xf32> -> vector<8x512xf32>
    %113 = vector.broadcast %1 : vector<1x512xf32> to vector<8x512xf32>
    %114 = arith.addf %112, %113 : vector<8x512xf32>
    %115 = vector.extract_strided_slice %114 {offsets = [0, 0], sizes = [8, 384], strides = [1, 1]} : vector<8x512xf32> to vector<8x384xf32>
    %116 = arith.negf %115 : vector<8x384xf32>
    %117 = math.exp %116 : vector<8x384xf32>
    %cst_36 = arith.constant 1.000000e+00 : f32
    %118 = vector.broadcast %cst_36 : f32 to vector<8x384xf32>
    %119 = arith.addf %118, %117 : vector<8x384xf32>
    %120 = arith.divf %118, %119 : vector<8x384xf32>
    %121 = vector.extract_strided_slice %114 {offsets = [0, 384], sizes = [8, 128], strides = [1, 1]} : vector<8x512xf32> to vector<8x128xf32>
    %122 = math.tanh %121 : vector<8x128xf32>
    %123 = vector.extract_strided_slice %120 {offsets = [0, 0], sizes = [8, 128], strides = [1, 1]} : vector<8x384xf32> to vector<8x128xf32>
    %124 = arith.mulf %101, %123 : vector<8x128xf32>
    %125 = vector.extract_strided_slice %120 {offsets = [0, 128], sizes = [8, 128], strides = [1, 1]} : vector<8x384xf32> to vector<8x128xf32>
    %126 = arith.mulf %125, %122 : vector<8x128xf32>
    %127 = arith.addf %124, %126 : vector<8x128xf32>
    %128 = vector.extract_strided_slice %120 {offsets = [0, 256], sizes = [8, 128], strides = [1, 1]} : vector<8x384xf32> to vector<8x128xf32>
    %129 = math.tanh %127 : vector<8x128xf32>
    %130 = arith.mulf %128, %129 : vector<8x128xf32>
    %c0_37 = arith.constant 0 : index
    %c4_38 = arith.constant 4 : index
    %c0_39 = arith.constant 0 : index
    %131 = vector.load %arg4[%c0_37, %c4_38, %c0_39] : memref<8x8x128xf32, #tpu.memory_space<vmem>>, vector<8x1x128xf32>
    %132 = vector.shape_cast %131 : vector<8x1x128xf32> to vector<8x128xf32>
    %133 = vector.shape_cast %130 : vector<8x128xf32> to vector<8x1x128xf32>
    tpu.vector_store %arg4[%c0_37, %c4_38, %c0_39], %133 {strides = array<i32>} : memref<8x8x128xf32, #tpu.memory_space<vmem>>, vector<8x1x128xf32>,
    %c0_40 = arith.constant 0 : index
    %c5 = arith.constant 5 : index
    %c0_41 = arith.constant 0 : index
    %134 = vector.load %arg1[%c0_40, %c5, %c0_41] : memref<8x8x128xf32, #tpu.memory_space<vmem>>, vector<8x1x128xf32>
    %135 = vector.shape_cast %134 : vector<8x1x128xf32> to vector<8x128xf32>
    %136 = arith.addf %130, %135 : vector<8x128xf32>
    %137 = arith.truncf %136 : vector<8x128xf32> to vector<8x128xbf16>
    %cst_42 = arith.constant dense<0.000000e+00> : vector<8x512xf32>
    %138 = tpu.matmul %137, %0, %cst_42 {dimension_numbers = #tpu.dot_dimension_numbers<[1], [0], [0], [1], [0, 0, 1, 1], [], []>} : vector<8x128xbf16>, vector<128x512xbf16>, vector<8x512xf32> -> vector<8x512xf32>
    %139 = vector.broadcast %1 : vector<1x512xf32> to vector<8x512xf32>
    %140 = arith.addf %138, %139 : vector<8x512xf32>
    %141 = vector.extract_strided_slice %140 {offsets = [0, 0], sizes = [8, 384], strides = [1, 1]} : vector<8x512xf32> to vector<8x384xf32>
    %142 = arith.negf %141 : vector<8x384xf32>
    %143 = math.exp %142 : vector<8x384xf32>
    %cst_43 = arith.constant 1.000000e+00 : f32
    %144 = vector.broadcast %cst_43 : f32 to vector<8x384xf32>
    %145 = arith.addf %144, %143 : vector<8x384xf32>
    %146 = arith.divf %144, %145 : vector<8x384xf32>
    %147 = vector.extract_strided_slice %140 {offsets = [0, 384], sizes = [8, 128], strides = [1, 1]} : vector<8x512xf32> to vector<8x128xf32>
    %148 = math.tanh %147 : vector<8x128xf32>
    %149 = vector.extract_strided_slice %146 {offsets = [0, 0], sizes = [8, 128], strides = [1, 1]} : vector<8x384xf32> to vector<8x128xf32>
    %150 = arith.mulf %127, %149 : vector<8x128xf32>
    %151 = vector.extract_strided_slice %146 {offsets = [0, 128], sizes = [8, 128], strides = [1, 1]} : vector<8x384xf32> to vector<8x128xf32>
    %152 = arith.mulf %151, %148 : vector<8x128xf32>
    %153 = arith.addf %150, %152 : vector<8x128xf32>
    %154 = vector.extract_strided_slice %146 {offsets = [0, 256], sizes = [8, 128], strides = [1, 1]} : vector<8x384xf32> to vector<8x128xf32>
    %155 = math.tanh %153 : vector<8x128xf32>
    %156 = arith.mulf %154, %155 : vector<8x128xf32>
    %c0_44 = arith.constant 0 : index
    %c5_45 = arith.constant 5 : index
    %c0_46 = arith.constant 0 : index
    %157 = vector.load %arg4[%c0_44, %c5_45, %c0_46] : memref<8x8x128xf32, #tpu.memory_space<vmem>>, vector<8x1x128xf32>
    %158 = vector.shape_cast %157 : vector<8x1x128xf32> to vector<8x128xf32>
    %159 = vector.shape_cast %156 : vector<8x128xf32> to vector<8x1x128xf32>
    tpu.vector_store %arg4[%c0_44, %c5_45, %c0_46], %159 {strides = array<i32>} : memref<8x8x128xf32, #tpu.memory_space<vmem>>, vector<8x1x128xf32>,
    %c0_47 = arith.constant 0 : index
    %c6 = arith.constant 6 : index
    %c0_48 = arith.constant 0 : index
    %160 = vector.load %arg1[%c0_47, %c6, %c0_48] : memref<8x8x128xf32, #tpu.memory_space<vmem>>, vector<8x1x128xf32>
    %161 = vector.shape_cast %160 : vector<8x1x128xf32> to vector<8x128xf32>
    %162 = arith.addf %156, %161 : vector<8x128xf32>
    %163 = arith.truncf %162 : vector<8x128xf32> to vector<8x128xbf16>
    %cst_49 = arith.constant dense<0.000000e+00> : vector<8x512xf32>
    %164 = tpu.matmul %163, %0, %cst_49 {dimension_numbers = #tpu.dot_dimension_numbers<[1], [0], [0], [1], [0, 0, 1, 1], [], []>} : vector<8x128xbf16>, vector<128x512xbf16>, vector<8x512xf32> -> vector<8x512xf32>
    %165 = vector.broadcast %1 : vector<1x512xf32> to vector<8x512xf32>
    %166 = arith.addf %164, %165 : vector<8x512xf32>
    %167 = vector.extract_strided_slice %166 {offsets = [0, 0], sizes = [8, 384], strides = [1, 1]} : vector<8x512xf32> to vector<8x384xf32>
    %168 = arith.negf %167 : vector<8x384xf32>
    %169 = math.exp %168 : vector<8x384xf32>
    %cst_50 = arith.constant 1.000000e+00 : f32
    %170 = vector.broadcast %cst_50 : f32 to vector<8x384xf32>
    %171 = arith.addf %170, %169 : vector<8x384xf32>
    %172 = arith.divf %170, %171 : vector<8x384xf32>
    %173 = vector.extract_strided_slice %166 {offsets = [0, 384], sizes = [8, 128], strides = [1, 1]} : vector<8x512xf32> to vector<8x128xf32>
    %174 = math.tanh %173 : vector<8x128xf32>
    %175 = vector.extract_strided_slice %172 {offsets = [0, 0], sizes = [8, 128], strides = [1, 1]} : vector<8x384xf32> to vector<8x128xf32>
    %176 = arith.mulf %153, %175 : vector<8x128xf32>
    %177 = vector.extract_strided_slice %172 {offsets = [0, 128], sizes = [8, 128], strides = [1, 1]} : vector<8x384xf32> to vector<8x128xf32>
    %178 = arith.mulf %177, %174 : vector<8x128xf32>
    %179 = arith.addf %176, %178 : vector<8x128xf32>
    %180 = vector.extract_strided_slice %172 {offsets = [0, 256], sizes = [8, 128], strides = [1, 1]} : vector<8x384xf32> to vector<8x128xf32>
    %181 = math.tanh %179 : vector<8x128xf32>
    %182 = arith.mulf %180, %181 : vector<8x128xf32>
    %c0_51 = arith.constant 0 : index
    %c6_52 = arith.constant 6 : index
    %c0_53 = arith.constant 0 : index
    %183 = vector.load %arg4[%c0_51, %c6_52, %c0_53] : memref<8x8x128xf32, #tpu.memory_space<vmem>>, vector<8x1x128xf32>
    %184 = vector.shape_cast %183 : vector<8x1x128xf32> to vector<8x128xf32>
    %185 = vector.shape_cast %182 : vector<8x128xf32> to vector<8x1x128xf32>
    tpu.vector_store %arg4[%c0_51, %c6_52, %c0_53], %185 {strides = array<i32>} : memref<8x8x128xf32, #tpu.memory_space<vmem>>, vector<8x1x128xf32>,
    %c0_54 = arith.constant 0 : index
    %c7 = arith.constant 7 : index
    %c0_55 = arith.constant 0 : index
    %186 = vector.load %arg1[%c0_54, %c7, %c0_55] : memref<8x8x128xf32, #tpu.memory_space<vmem>>, vector<8x1x128xf32>
    %187 = vector.shape_cast %186 : vector<8x1x128xf32> to vector<8x128xf32>
    %188 = arith.addf %182, %187 : vector<8x128xf32>
    %189 = arith.truncf %188 : vector<8x128xf32> to vector<8x128xbf16>
    %cst_56 = arith.constant dense<0.000000e+00> : vector<8x512xf32>
    %190 = tpu.matmul %189, %0, %cst_56 {dimension_numbers = #tpu.dot_dimension_numbers<[1], [0], [0], [1], [0, 0, 1, 1], [], []>} : vector<8x128xbf16>, vector<128x512xbf16>, vector<8x512xf32> -> vector<8x512xf32>
    %191 = vector.broadcast %1 : vector<1x512xf32> to vector<8x512xf32>
    %192 = arith.addf %190, %191 : vector<8x512xf32>
    %193 = vector.extract_strided_slice %192 {offsets = [0, 0], sizes = [8, 384], strides = [1, 1]} : vector<8x512xf32> to vector<8x384xf32>
    %194 = arith.negf %193 : vector<8x384xf32>
    %195 = math.exp %194 : vector<8x384xf32>
    %cst_57 = arith.constant 1.000000e+00 : f32
    %196 = vector.broadcast %cst_57 : f32 to vector<8x384xf32>
    %197 = arith.addf %196, %195 : vector<8x384xf32>
    %198 = arith.divf %196, %197 : vector<8x384xf32>
    %199 = vector.extract_strided_slice %192 {offsets = [0, 384], sizes = [8, 128], strides = [1, 1]} : vector<8x512xf32> to vector<8x128xf32>
    %200 = math.tanh %199 : vector<8x128xf32>
    %201 = vector.extract_strided_slice %198 {offsets = [0, 0], sizes = [8, 128], strides = [1, 1]} : vector<8x384xf32> to vector<8x128xf32>
    %202 = arith.mulf %179, %201 : vector<8x128xf32>
    %203 = vector.extract_strided_slice %198 {offsets = [0, 128], sizes = [8, 128], strides = [1, 1]} : vector<8x384xf32> to vector<8x128xf32>
    %204 = arith.mulf %203, %200 : vector<8x128xf32>
    %205 = arith.addf %202, %204 : vector<8x128xf32>
    %206 = vector.extract_strided_slice %198 {offsets = [0, 256], sizes = [8, 128], strides = [1, 1]} : vector<8x384xf32> to vector<8x128xf32>
    %207 = math.tanh %205 : vector<8x128xf32>
    %208 = arith.mulf %206, %207 : vector<8x128xf32>
    %c0_58 = arith.constant 0 : index
    %c7_59 = arith.constant 7 : index
    %c0_60 = arith.constant 0 : index
    %209 = vector.load %arg4[%c0_58, %c7_59, %c0_60] : memref<8x8x128xf32, #tpu.memory_space<vmem>>, vector<8x1x128xf32>
    %210 = vector.shape_cast %209 : vector<8x1x128xf32> to vector<8x128xf32>
    %211 = vector.shape_cast %208 : vector<8x128xf32> to vector<8x1x128xf32>
    tpu.vector_store %arg4[%c0_58, %c7_59, %c0_60], %211 {strides = array<i32>} : memref<8x8x128xf32, #tpu.memory_space<vmem>>, vector<8x1x128xf32>,
    %c0_61 = arith.constant 0 : index
    %c0_62 = arith.constant 0 : index
    %212 = vector.load %arg5[%c0_61, %c0_62] : memref<8x128xf32, #tpu.memory_space<vmem>>, vector<8x128xf32>
    tpu.vector_store %arg5[%c0_61, %c0_62], %208 {strides = array<i32>} : memref<8x128xf32, #tpu.memory_space<vmem>>, vector<8x128xf32>,
    %c0_63 = arith.constant 0 : index
    %c0_64 = arith.constant 0 : index
    %213 = vector.load %arg6[%c0_63, %c0_64] : memref<8x128xf32, #tpu.memory_space<vmem>>, vector<8x128xf32>
    tpu.vector_store %arg6[%c0_63, %c0_64], %205 {strides = array<i32>} : memref<8x128xf32, #tpu.memory_space<vmem>>, vector<8x128xf32>,
    return
  }
  func.func @transform_0(%arg0: i32) -> (i32, i32, i32) {
    %c0_i32 = arith.constant 0 : i32
    %c0_i32_0 = arith.constant 0 : i32
    %c0_i32_1 = arith.constant 0 : i32
    return %arg0, %c0_i32, %c0_i32_0 : i32, i32, i32
  }
  func.func @transform_1(%arg0: i32) -> (i32, i32) {
    %c0_i32 = arith.constant 0 : i32
    %c0_i32_0 = arith.constant 0 : i32
    %c0_i32_1 = arith.constant 0 : i32
    return %c0_i32, %c0_i32_0 : i32, i32
  }
  func.func @transform_2(%arg0: i32) -> (i32, i32) {
    %c0_i32 = arith.constant 0 : i32
    %c0_i32_0 = arith.constant 0 : i32
    %c0_i32_1 = arith.constant 0 : i32
    return %c0_i32, %c0_i32_0 : i32, i32
  }
  func.func @transform_3(%arg0: i32) -> (i32, i32, i32) {
    %c0_i32 = arith.constant 0 : i32
    %c0_i32_0 = arith.constant 0 : i32
    %c0_i32_1 = arith.constant 0 : i32
    return %arg0, %c0_i32, %c0_i32_0 : i32, i32, i32
  }
  func.func @transform_4(%arg0: i32) -> (i32, i32) {
    %c0_i32 = arith.constant 0 : i32
    %c0_i32_0 = arith.constant 0 : i32
    return %arg0, %c0_i32 : i32, i32
  }
  func.func @transform_5(%arg0: i32) -> (i32, i32) {
    %c0_i32 = arith.constant 0 : i32
    %c0_i32_0 = arith.constant 0 : i32
    return %arg0, %c0_i32 : i32, i32
  }
}

</mosaic_0001>

<llo_original>
// kernel: my_lstm_forward.1
$region0: #{my_lstm_forward.1}
  #allocation0 [shape = 'u32[]', space=smem, size = 0x4, offset = 0x4, fixed_abs, tag = 'smem constant byte address 0x4 - core index']
  #allocation1 [shape = 'u32[144,128]{1,0:T(1,128)}', space=vmem, size = 0x12000, scoped, tag = 'internal scratch']
  %s0 = inlined_call_operand.hbm [shape: f32[8,8,128], index: 0, kind: input, shape index: {}]
  %s1 = inlined_call_operand.hbm [shape: bf16[128,512], index: 1, kind: input, shape index: {}]
  %s2 = inlined_call_operand.vmem [shape: f32[1,512], index: 2, kind: input, shape index: {}]
  %s3 = inlined_call_operand.hbm [shape: f32[8,8,128], index: 3, kind: output, shape index: {0}]
  %s4 = inlined_call_operand.hbm [shape: f32[8,128], index: 4, kind: output, shape index: {1}]
  %s5 = inlined_call_operand.hbm [shape: f32[8,128], index: 5, kind: output, shape index: {2}]
  %6 = xla_tuple %s3, %s4, %s5
  %s7 = sld [smem:[#allocation0]]
  $region46: #{my_lstm_forward.1} parent=0
    _
  %s9 = ssub.s32 1, %s7
  %s10 = scalar_select 0, %s9, %s7
  $region1: #{my_lstm_forward.1} parent=0
    #allocation2 [shape = 'u8[32768]{0}', space=vmem, size = 0x8000, scoped, tag = 'input window, operand 0, single buffered']
    #allocation3 [shape = 's32[1]{0}', space=sflag, size = 0x4, scoped, tag = 'scoped memory for my_lstm_forward.1']
    #allocation4 [shape = 's32[1]{0}', space=sflag, size = 0x4, scoped, tag = 'scoped memory for my_lstm_forward.1']
    #allocation5 [shape = 'u8[131072]{0}', space=vmem, size = 0x20000, scoped, tag = 'input window, operand 1, single buffered']
    #allocation6 [shape = 's32[1]{0}', space=sflag, size = 0x4, scoped, tag = 'scoped memory for my_lstm_forward.1']
    #allocation7 [shape = 'u8[32768]{0}', space=vmem, size = 0x8000, scoped, tag = 'output window, operand 0, single buffered']
    #allocation8 [shape = 'u8[4096]{0}', space=vmem, size = 0x1000, scoped, tag = 'output window, operand 1, single buffered']
    #allocation9 [shape = 's32[1]{0}', space=sflag, size = 0x4, scoped, tag = 'scoped memory for my_lstm_forward.1']
    #allocation10 [shape = 'u8[4096]{0}', space=vmem, size = 0x1000, scoped, tag = 'output window, operand 2, single buffered']
    %11 = vsyncpa [#allocation3], 0
    %12 = vsyncpa [#allocation6], 0
    %13 = vsyncpa [#allocation4], 0
    %14 = vsyncpa [#allocation9], 0
    // Predicated region
    $region2: #{my_lstm_forward.1} parent=1 // pred_check
      _
    $region3: #{my_lstm_forward.1} parent=1 // pred_check_branch
      %16 = sbr.rel (0) target = $region5
    $region4: #{my_lstm_forward.1} parent=1 // pred_region
      %s18 = ssub.s32 1024, 1024
      %19 = vsyncadd [#allocation3], %s18
      %s20 = sshll.u32 [#allocation2], 4
      %s21 = int_to_ptr.vmem [resolvable:$true] %s20
      %26 = dma.hbm_to_vmem [thread:$0]  %s0, 1024, %s21, [#allocation3], 128, 128, 8
    $region5: #{my_lstm_forward.1} parent=1 // pred_fallthru
      _
    // Predicated region
    $region6: #{my_lstm_forward.1} parent=1 // pred_check
      _
    $region7: #{my_lstm_forward.1} parent=1 // pred_check_branch
      %28 = sbr.rel (0) target = $region9
    $region8: #{my_lstm_forward.1} parent=1 // pred_region
      %s30 = ssub.s32 4096, 4096
      %31 = vsyncadd [#allocation6], %s30
      %s32 = sshll.u32 [#allocation5], 4
      %s33 = int_to_ptr.vmem [resolvable:$true] %s32
      %38 = dma.hbm_to_vmem [thread:$0]  %s1, 4096, %s33, [#allocation6], 256, 256, 16
    $region9: #{my_lstm_forward.1} parent=1 // pred_fallthru
      _
    // Predicated region
    $region10: #{my_lstm_forward.1} parent=1 // pred_check
      _
    $region11: #{my_lstm_forward.1} parent=1 // pred_check_branch
      %40 = sbr.rel (0) target = $region13
    $region12: #{my_lstm_forward.1} parent=1 // pred_region
      _
    $region13: #{my_lstm_forward.1} parent=1 // pred_fallthru
      _
    // Predicated region
    $region14: #{my_lstm_forward.1} parent=1 // pred_check
      _
    $region15: #{my_lstm_forward.1} parent=1 // pred_check_branch
      %42 = sbr.rel (0) target = $region17
    $region16: #{my_lstm_forward.1} parent=1 // pred_region
      %43 = dma.done [#allocation3], 1024
    $region17: #{my_lstm_forward.1} parent=1 // pred_fallthru
      _
    // Predicated region
    $region18: #{my_lstm_forward.1} parent=1 // pred_check
      _
    $region19: #{my_lstm_forward.1} parent=1 // pred_check_branch
      %45 = sbr.rel (0) target = $region21
    $region20: #{my_lstm_forward.1} parent=1 // pred_region
      %46 = dma.done [#allocation6], 4096
    $region21: #{my_lstm_forward.1} parent=1 // pred_fallthru
      _
    %v48 = vld [vmem:[#allocation5] sm:$0xff]
    %v49 = vld [vmem:[#allocation5 + $0x8] sm:$0xff]
    %v50 = vld [vmem:[#allocation5 + $0x10] sm:$0xff]
    %v51 = vld [vmem:[#allocation5 + $0x18] sm:$0xff]
    %v52 = vld [vmem:[#allocation5 + $0x20] sm:$0xff]
    %v53 = vld [vmem:[#allocation5 + $0x28] sm:$0xff]
    %v54 = vld [vmem:[#allocation5 + $0x30] sm:$0xff]
    %v55 = vld [vmem:[#allocation5 + $0x38] sm:$0xff]
    %v56 = vld [vmem:[#allocation5 + $0x40] sm:$0xff]
    %v57 = vld [vmem:[#allocation5 + $0x48] sm:$0xff]
    %v58 = vld [vmem:[#allocation5 + $0x50] sm:$0xff]
    %v59 = vld [vmem:[#allocation5 + $0x58] sm:$0xff]
    %v60 = vld [vmem:[#allocation5 + $0x60] sm:$0xff]
    %v61 = vld [vmem:[#allocation5 + $0x68] sm:$0xff]
    %v62 = vld [vmem:[#allocation5 + $0x70] sm:$0xff]
    %v63 = vld [vmem:[#allocation5 + $0x78] sm:$0xff]
    %v64 = vld [vmem:[#allocation5 + $0x80] sm:$0xff]
    %v65 = vld [vmem:[#allocation5 + $0x88] sm:$0xff]
    %v66 = vld [vmem:[#allocation5 + $0x90] sm:$0xff]
    %v67 = vld [vmem:[#allocation5 + $0x98] sm:$0xff]
    %v68 = vld [vmem:[#allocation5 + $0xa0] sm:$0xff]
    %v69 = vld [vmem:[#allocation5 + $0xa8] sm:$0xff]
    %v70 = vld [vmem:[#allocation5 + $0xb0] sm:$0xff]
    %v71 = vld [vmem:[#allocation5 + $0xb8] sm:$0xff]
    %v72 = vld [vmem:[#allocation5 + $0xc0] sm:$0xff]
    %v73 = vld [vmem:[#allocation5 + $0xc8] sm:$0xff]
    %v74 = vld [vmem:[#allocation5 + $0xd0] sm:$0xff]
    %v75 = vld [vmem:[#allocation5 + $0xd8] sm:$0xff]
    %v76 = vld [vmem:[#allocation5 + $0xe0] sm:$0xff]
    %v77 = vld [vmem:[#allocation5 + $0xe8] sm:$0xff]
    %v78 = vld [vmem:[#allocation5 + $0xf0] sm:$0xff]
    %v79 = vld [vmem:[#allocation5 + $0xf8] sm:$0xff]
    %v80 = vld [vmem:[%s2] sm:$0xf]
    %v81 = vld [vmem:[#allocation2] sm:$0x1]
    %v82 = vld [vmem:[#allocation2 + $0x8] sm:$0x1]
    %v83 = vld [vmem:[#allocation2 + $0x10] sm:$0x1]
    %v84 = vld [vmem:[#allocation2 + $0x18] sm:$0x1]
    %v85 = vld [vmem:[#allocation2 + $0x20] sm:$0x1]
    %v86 = vld [vmem:[#allocation2 + $0x28] sm:$0x1]
    %v87 = vld [vmem:[#allocation2 + $0x30] sm:$0x1]
    %v88 = vld [vmem:[#allocation2 + $0x38] sm:$0x1]
    %v89 = vadd.f32 %v81, 0.0
    %v90 = vadd.f32 %v82, 0.0
    %v91 = vadd.f32 %v83, 0.0
    %v92 = vadd.f32 %v84, 0.0
    %v93 = vadd.f32 %v85, 0.0
    %v94 = vadd.f32 %v86, 0.0
    %v95 = vadd.f32 %v87, 0.0
    %v96 = vadd.f32 %v88, 0.0
    %v97 = vpack.c.bf16 %v89, %v89
    %v98 = vpack.c.bf16 %v90, %v90
    %v99 = vpack.c.bf16 %v91, %v91
    %v100 = vpack.c.bf16 %v92, %v92
    %v101 = vpack.c.bf16 %v93, %v93
    %v102 = vpack.c.bf16 %v94, %v94
    %v103 = vpack.c.bf16 %v95, %v95
    %v104 = vpack.c.bf16 %v96, %v96
    %v106 = vlaneseq
    %v107 = vshrl.u32 %v106, 7
    %v108 = vsub.s32 0, %v107
    %v109 = vrot.slane %v80, %v108
    %v110 = vlaneseq
    %v111 = vshrl.u32 %v110, 7
    %v112 = vsub.s32 1, %v111
    %v113 = vrot.slane %v80, %v112
    %v114 = vlaneseq
    %v115 = vshrl.u32 %v114, 7
    %v116 = vsub.s32 2, %v115
    %v117 = vrot.slane %v80, %v116
    %v118 = vlaneseq
    %v119 = vshrl.u32 %v118, 7
    %v120 = vsub.s32 3, %v119
    %v121 = vrot.slane %v80, %v120
    %v134 = vunpack.c.l.b16 %v97
    %v135 = vunpack.c.l.b16 %v98
    %v136 = vunpack.c.l.b16 %v99
    %v137 = vunpack.c.l.b16 %v100
    %v138 = vunpack.c.l.b16 %v101
    %v139 = vunpack.c.l.b16 %v102
    %v140 = vunpack.c.l.b16 %v103
    %v141 = vunpack.c.l.b16 %v104
    %v142 = vrot.slane %v135, 7
    %vm143 = vcmask 1041409
    %v144 = vsel %vm143, %v142, %v134
    %v145 = vrot.slane %v136, 6
    %vm146 = vcmask 1042434
    %v147 = vsel %vm146, %v145, %v144
    %v148 = vrot.slane %v137, 5
    %vm149 = vcmask 1043459
    %v150 = vsel %vm149, %v148, %v147
    %v151 = vrot.slane %v138, 4
    %vm152 = vcmask 1044484
    %v153 = vsel %vm152, %v151, %v150
    %v154 = vrot.slane %v139, 3
    %vm155 = vcmask 1045509
    %v156 = vsel %vm155, %v154, %v153
    %v157 = vrot.slane %v140, 2
    %vm158 = vcmask 1046534
    %v159 = vsel %vm158, %v157, %v156
    %v160 = vrot.slane %v141, 1
    %vm161 = vcmask 1047559
    %v162 = vsel %vm161, %v160, %v159
    %v163 = vpack.c.b16 %v162, %v162
    %v197 = vunpack.c.l.b16 %v48
    %v198 = vunpack.c.h.b16 %v48
    %v199 = vunpack.c.l.b16 %v49
    %v200 = vunpack.c.h.b16 %v49
    %v201 = vunpack.c.l.b16 %v50
    %v202 = vunpack.c.h.b16 %v50
    %v203 = vunpack.c.l.b16 %v51
    %v204 = vunpack.c.h.b16 %v51
    %v205 = vunpack.c.l.b16 %v52
    %v206 = vunpack.c.h.b16 %v52
    %v207 = vunpack.c.l.b16 %v53
    %v208 = vunpack.c.h.b16 %v53
    %v209 = vunpack.c.l.b16 %v54
    %v210 = vunpack.c.h.b16 %v54
    %v211 = vunpack.c.l.b16 %v55
    %v212 = vunpack.c.h.b16 %v55
    %v213 = vunpack.c.l.b16 %v56
    %v214 = vunpack.c.h.b16 %v56
    %v215 = vunpack.c.l.b16 %v57
    %v216 = vunpack.c.h.b16 %v57
    %v217 = vunpack.c.l.b16 %v58
    %v218 = vunpack.c.h.b16 %v58
    %v219 = vunpack.c.l.b16 %v59
    %v220 = vunpack.c.h.b16 %v59
    %v221 = vunpack.c.l.b16 %v60
    %v222 = vunpack.c.h.b16 %v60
    %v223 = vunpack.c.l.b16 %v61
    %v224 = vunpack.c.h.b16 %v61
    %v225 = vunpack.c.l.b16 %v62
    %v226 = vunpack.c.h.b16 %v62
    %v227 = vunpack.c.l.b16 %v63
    %v228 = vunpack.c.h.b16 %v63
    %v229 = vunpack.c.l.b16 %v64
    %v230 = vunpack.c.h.b16 %v64
    %v231 = vunpack.c.l.b16 %v65
    %v232 = vunpack.c.h.b16 %v65
    %v233 = vunpack.c.l.b16 %v66
    %v234 = vunpack.c.h.b16 %v66
    %v235 = vunpack.c.l.b16 %v67
    %v236 = vunpack.c.h.b16 %v67
    %v237 = vunpack.c.l.b16 %v68
    %v238 = vunpack.c.h.b16 %v68
    %v239 = vunpack.c.l.b16 %v69
    %v240 = vunpack.c.h.b16 %v69
    %v241 = vunpack.c.l.b16 %v70
    %v242 = vunpack.c.h.b16 %v70
    %v243 = vunpack.c.l.b16 %v71
    %v244 = vunpack.c.h.b16 %v71
    %v245 = vunpack.c.l.b16 %v72
    %v246 = vunpack.c.h.b16 %v72
    %v247 = vunpack.c.l.b16 %v73
    %v248 = vunpack.c.h.b16 %v73
    %v249 = vunpack.c.l.b16 %v74
    %v250 = vunpack.c.h.b16 %v74
    %v251 = vunpack.c.l.b16 %v75
    %v252 = vunpack.c.h.b16 %v75
    %v253 = vunpack.c.l.b16 %v76
    %v254 = vunpack.c.h.b16 %v76
    %v255 = vunpack.c.l.b16 %v77
    %v256 = vunpack.c.h.b16 %v77
    %v257 = vunpack.c.l.b16 %v78
    %v258 = vunpack.c.h.b16 %v78
    %v259 = vunpack.c.l.b16 %v79
    %v260 = vunpack.c.h.b16 %v79
    %v261 = vpack.c.b16 %v201, %v197
    %v262 = vpack.c.b16 %v202, %v198
    %v263 = vpack.c.b16 %v203, %v199
    %v264 = vpack.c.b16 %v204, %v200
    %v265 = vpack.c.b16 %v209, %v205
    %v266 = vpack.c.b16 %v210, %v206
    %v267 = vpack.c.b16 %v211, %v207
    %v268 = vpack.c.b16 %v212, %v208
    %v269 = vpack.c.b16 %v217, %v213
    %v270 = vpack.c.b16 %v218, %v214
    %v271 = vpack.c.b16 %v219, %v215
    %v272 = vpack.c.b16 %v220, %v216
    %v273 = vpack.c.b16 %v225, %v221
    %v274 = vpack.c.b16 %v226, %v222
    %v275 = vpack.c.b16 %v227, %v223
    %v276 = vpack.c.b16 %v228, %v224
    %v277 = vpack.c.b16 %v233, %v229
    %v278 = vpack.c.b16 %v234, %v230
    %v279 = vpack.c.b16 %v235, %v231
    %v280 = vpack.c.b16 %v236, %v232
    %v281 = vpack.c.b16 %v241, %v237
    %v282 = vpack.c.b16 %v242, %v238
    %v283 = vpack.c.b16 %v243, %v239
    %v284 = vpack.c.b16 %v244, %v240
    %v285 = vpack.c.b16 %v249, %v245
    %v286 = vpack.c.b16 %v250, %v246
    %v287 = vpack.c.b16 %v251, %v247
    %v288 = vpack.c.b16 %v252, %v248
    %v289 = vpack.c.b16 %v257, %v253
    %v290 = vpack.c.b16 %v258, %v254
    %v291 = vpack.c.b16 %v259, %v255
    %v292 = vpack.c.b16 %v260, %v256
    %325 = vmatprep.subr.bf16.mxu0 %v262
    %326 = vmatpush1.bf16.msra.mxu0 %v261
    %327 = vmatprep.subr.bf16.mxu0 %v266
    %328 = vmatpush1.bf16.msra.mxu0 %v265
    %329 = vmatprep.subr.bf16.mxu0 %v270
    %330 = vmatpush1.bf16.msra.mxu0 %v269
    %331 = vmatprep.subr.bf16.mxu0 %v274
    %332 = vmatpush1.bf16.msra.mxu0 %v273
    %333 = vmatprep.subr.bf16.mxu0 %v278
    %334 = vmatpush1.bf16.msra.mxu0 %v277
    %335 = vmatprep.subr.bf16.mxu0 %v282
    %336 = vmatpush1.bf16.msra.mxu0 %v281
    %337 = vmatprep.subr.bf16.mxu0 %v286
    %338 = vmatpush1.bf16.msra.mxu0 %v285
    %339 = vmatprep.subr.bf16.mxu0 %v290
    %340 = vmatpush1.bf16.msra.mxu0 %v289
    %341 = vmatprep.subr.bf16.mxu0 0
    %342 = vmatpush1.bf16.msra.mxu0 0
    %343 = vmatprep.subr.bf16.mxu0 0
    %344 = vmatpush1.bf16.msra.mxu0 0
    %345 = vmatprep.subr.bf16.mxu0 0
    %346 = vmatpush1.bf16.msra.mxu0 0
    %347 = vmatprep.subr.bf16.mxu0 0
    %348 = vmatpush1.bf16.msra.mxu0 0
    %349 = vmatprep.subr.bf16.mxu0 0
    %350 = vmatpush1.bf16.msra.mxu0 0
    %351 = vmatprep.subr.bf16.mxu0 0
    %352 = vmatpush1.bf16.msra.mxu0 0
    %353 = vmatprep.subr.bf16.mxu0 0
    %354 = vmatpush1.bf16.msra.mxu0 0
    %355 = vmatprep.subr.bf16.mxu0 0
    %356 = vmatpush1.bf16.msra.mxu0 0
    %357 = vmatprep.mubr.bf16.mxu0 0
    %358 = vmatmul.mubr.bf16.gmra.mrb[0].mxu0 %v163
    %v359 = vpop.f32.mrb[0].mxu0
    %v360 = vadd.f32 %v109, %v359
    %v361 = vpop.f32.mrb[0].mxu0
    %v362 = vadd.f32 %v113, %v361
    %v363 = vpop.f32.mrb[0].mxu0
    %v364 = vpop.f32.mrb[0].mxu0
    %365 = vdwg.mxu0
    %366 = vmatprep.subr.bf16.mxu0 %v264
    %367 = vmatpush1.bf16.msra.mxu0 %v263
    %368 = vmatprep.subr.bf16.mxu0 %v268
    %369 = vmatpush1.bf16.msra.mxu0 %v267
    %370 = vmatprep.subr.bf16.mxu0 %v272
    %371 = vmatpush1.bf16.msra.mxu0 %v271
    %372 = vmatprep.subr.bf16.mxu0 %v276
    %373 = vmatpush1.bf16.msra.mxu0 %v275
    %374 = vmatprep.subr.bf16.mxu0 %v280
    %375 = vmatpush1.bf16.msra.mxu0 %v279
    %376 = vmatprep.subr.bf16.mxu0 %v284
    %377 = vmatpush1.bf16.msra.mxu0 %v283
    %378 = vmatprep.subr.bf16.mxu0 %v288
    %379 = vmatpush1.bf16.msra.mxu0 %v287
    %380 = vmatprep.subr.bf16.mxu0 %v292
    %381 = vmatpush1.bf16.msra.mxu0 %v291
    %382 = vmatprep.subr.bf16.mxu0 0
    %383 = vmatpush1.bf16.msra.mxu0 0
    %384 = vmatprep.subr.bf16.mxu0 0
    %385 = vmatpush1.bf16.msra.mxu0 0
    %386 = vmatprep.subr.bf16.mxu0 0
    %387 = vmatpush1.bf16.msra.mxu0 0
    %388 = vmatprep.subr.bf16.mxu0 0
    %389 = vmatpush1.bf16.msra.mxu0 0
    %390 = vmatprep.subr.bf16.mxu0 0
    %391 = vmatpush1.bf16.msra.mxu0 0
    %392 = vmatprep.subr.bf16.mxu0 0
    %393 = vmatpush1.bf16.msra.mxu0 0
    %394 = vmatprep.subr.bf16.mxu0 0
    %395 = vmatpush1.bf16.msra.mxu0 0
    %396 = vmatprep.subr.bf16.mxu0 0
    %397 = vmatpush1.bf16.msra.mxu0 0
    %398 = vmatprep.mubr.bf16.mxu0 0
    %399 = vmatmul.mubr.bf16.gmra.mrb[0].mxu0 %v163
    %v400 = vpop.f32.mrb[0].mxu0
    %v401 = vadd.f32 %v117, %v400
    %v402 = vpop.f32.mrb[0].mxu0
    %v403 = vadd.f32 %v121, %v402
    %v404 = vpop.f32.mrb[0].mxu0
    %v405 = vpop.f32.mrb[0].mxu0
    %406 = vdwg.mxu0
    %v407 = vxor.u32 %v360, 2147483648
    %v408 = vxor.u32 %v362, 2147483648
    %v409 = vxor.u32 %v401, 2147483648
    %v410 = vmul.f32 %v407, 1.442695
    %v411 = vpow.pop %v410
    %v412 = vmul.f32 %v408, 1.442695
    %v413 = vpow.pop %v412
    %v414 = vmul.f32 %v409, 1.442695
    %v415 = vpow.pop %v414
    %v416 = vadd.f32 %v411, 1.0
    %v417 = vadd.f32 %v413, 1.0
    %v418 = vadd.f32 %v415, 1.0
    %v419 = vrcp.pop %v416
    %v420 = vmul.f32 1.0, %v419
    %v421 = vrcp.pop %v417
    %v422 = vmul.f32 1.0, %v421
    %v423 = vrcp.pop %v418
    %v424 = vmul.f32 1.0, %v423
    %v425 = vtanh.pop %v403
    %v426 = vmul.f32 %v420, 0.0
    %v427 = vmul.f32 %v422, %v425
    %v428 = vadd.f32 %v426, %v427
    %v429 = vtanh.pop %v428
    %v430 = vmul.f32 %v424, %v429
    %v432 = vcombine.high %v430, %v430
    %v434 = vunpack.c.l.s4 1966171168
    %v435 = vunpack.c.0.s8 %v434
    %v436 = vlaneseq
    %v437 = vshrl.u32 %v436, 7
    %v438 = vsub.s32 %v435, %v437
    %v439 = vrot.slane %v430, %v438
    %v441 = vunpack.c.l.s4 1966171168
    %v442 = vunpack.c.0.s8 %v441
    %v443 = vlaneseq
    %v444 = vshrl.u32 %v443, 7
    %v445 = vsub.s32 %v442, %v444
    %v446 = vrot.slane %v432, %v445
    %v447 = vcombine.high %v439, %v439
    %v448 = vcombine.high %v446, %v446
    %v450 = vunpack.c.l.s4 1966171168
    %v451 = vunpack.c.0.s8 %v450
    %v452 = vlaneseq
    %v453 = vshrl.u32 %v452, 7
    %v454 = vsub.s32 %v451, %v453
    %v455 = vrot.slane %v439, %v454
    %v457 = vunpack.c.l.s4 1966171168
    %v458 = vunpack.c.0.s8 %v457
    %v459 = vlaneseq
    %v460 = vshrl.u32 %v459, 7
    %v461 = vsub.s32 %v458, %v460
    %v462 = vrot.slane %v446, %v461
    %v464 = vunpack.c.l.s4 1966171168
    %v465 = vunpack.c.0.s8 %v464
    %v466 = vlaneseq
    %v467 = vshrl.u32 %v466, 7
    %v468 = vsub.s32 %v465, %v467
    %v469 = vrot.slane %v447, %v468
    %v471 = vunpack.c.l.s4 1966171168
    %v472 = vunpack.c.0.s8 %v471
    %v473 = vlaneseq
    %v474 = vshrl.u32 %v473, 7
    %v475 = vsub.s32 %v472, %v474
    %v476 = vrot.slane %v448, %v475
    %v477 = vcombine.high %v455, %v455
    %v478 = vcombine.high %v462, %v462
    %v479 = vcombine.high %v469, %v469
    %v480 = vcombine.high %v476, %v476
    %489 = vst [vmem:[#allocation7] sm:$0x1] %v455
    %490 = vst [vmem:[#allocation7 + $0x8] sm:$0x1] %v469
    %491 = vst [vmem:[#allocation7 + $0x10] sm:$0x1] %v477
    %492 = vst [vmem:[#allocation7 + $0x18] sm:$0x1] %v479
    %493 = vst [vmem:[#allocation7 + $0x20] sm:$0x1] %v462
    %494 = vst [vmem:[#allocation7 + $0x28] sm:$0x1] %v476
    %495 = vst [vmem:[#allocation7 + $0x30] sm:$0x1] %v478
    %496 = vst [vmem:[#allocation7 + $0x38] sm:$0x1] %v480
    %v497 = vld [vmem:[#allocation2 + $0x1] sm:$0x1]
    %v498 = vld [vmem:[#allocation2 + $0x9] sm:$0x1]
    %v499 = vld [vmem:[#allocation2 + $0x11] sm:$0x1]
    %v500 = vld [vmem:[#allocation2 + $0x19] sm:$0x1]
    %v501 = vld [vmem:[#allocation2 + $0x21] sm:$0x1]
    %v502 = vld [vmem:[#allocation2 + $0x29] sm:$0x1]
    %v503 = vld [vmem:[#allocation2 + $0x31] sm:$0x1]
    %v504 = vld [vmem:[#allocation2 + $0x39] sm:$0x1]
    %v513 = vrot.slane %v498, 7
    %v514 = vsel %vm143, %v513, %v497
    %v515 = vrot.slane %v499, 6
    %v516 = vsel %vm146, %v515, %v514
    %v517 = vrot.slane %v500, 5
    %v518 = vsel %vm149, %v517, %v516
    %v519 = vrot.slane %v501, 4
    %v520 = vsel %vm152, %v519, %v518
    %v521 = vrot.slane %v502, 3
    %v522 = vsel %vm155, %v521, %v520
    %v523 = vrot.slane %v503, 2
    %v524 = vsel %vm158, %v523, %v522
    %v525 = vrot.slane %v504, 1
    %v526 = vsel %vm161, %v525, %v524
    %v528 = vadd.f32 %v430, %v526
    %v529 = vpack.c.bf16 %v528, %v528
    %530 = vmatprep.subr.bf16.mxu0 %v262
    %531 = vmatpush1.bf16.msra.mxu0 %v261
    %532 = vmatprep.subr.bf16.mxu0 %v266
    %533 = vmatpush1.bf16.msra.mxu0 %v265
    %534 = vmatprep.subr.bf16.mxu0 %v270
    %535 = vmatpush1.bf16.msra.mxu0 %v269
    %536 = vmatprep.subr.bf16.mxu0 %v274
    %537 = vmatpush1.bf16.msra.mxu0 %v273
    %538 = vmatprep.subr.bf16.mxu0 %v278
    %539 = vmatpush1.bf16.msra.mxu0 %v277
    %540 = vmatprep.subr.bf16.mxu0 %v282
    %541 = vmatpush1.bf16.msra.mxu0 %v281
    %542 = vmatprep.subr.bf16.mxu0 %v286
    %543 = vmatpush1.bf16.msra.mxu0 %v285
    %544 = vmatprep.subr.bf16.mxu0 %v290
    %545 = vmatpush1.bf16.msra.mxu0 %v289
    %546 = vmatprep.subr.bf16.mxu0 0
    %547 = vmatpush1.bf16.msra.mxu0 0
    %548 = vmatprep.subr.bf16.mxu0 0
    %549 = vmatpush1.bf16.msra.mxu0 0
    %550 = vmatprep.subr.bf16.mxu0 0
    %551 = vmatpush1.bf16.msra.mxu0 0
    %552 = vmatprep.subr.bf16.mxu0 0
    %553 = vmatpush1.bf16.msra.mxu0 0
    %554 = vmatprep.subr.bf16.mxu0 0
    %555 = vmatpush1.bf16.msra.mxu0 0
    %556 = vmatprep.subr.bf16.mxu0 0
    %557 = vmatpush1.bf16.msra.mxu0 0
    %558 = vmatprep.subr.bf16.mxu0 0
    %559 = vmatpush1.bf16.msra.mxu0 0
    %560 = vmatprep.subr.bf16.mxu0 0
    %561 = vmatpush1.bf16.msra.mxu0 0
    %562 = vmatprep.mubr.bf16.mxu0 0
    %563 = vmatmul.mubr.bf16.gmra.mrb[0].mxu0 %v529
    %v564 = vpop.f32.mrb[0].mxu0
    %v565 = vadd.f32 %v109, %v564
    %v566 = vpop.f32.mrb[0].mxu0
    %v567 = vadd.f32 %v113, %v566
    %v568 = vpop.f32.mrb[0].mxu0
    %v569 = vpop.f32.mrb[0].mxu0
    %570 = vdwg.mxu0
    %571 = vmatprep.subr.bf16.mxu0 %v264
    %572 = vmatpush1.bf16.msra.mxu0 %v263
    %573 = vmatprep.subr.bf16.mxu0 %v268
    %574 = vmatpush1.bf16.msra.mxu0 %v267
    %575 = vmatprep.subr.bf16.mxu0 %v272
    %576 = vmatpush1.bf16.msra.mxu0 %v271
    %577 = vmatprep.subr.bf16.mxu0 %v276
    %578 = vmatpush1.bf16.msra.mxu0 %v275
    %579 = vmatprep.subr.bf16.mxu0 %v280
    %580 = vmatpush1.bf16.msra.mxu0 %v279
    %581 = vmatprep.subr.bf16.mxu0 %v284
    %582 = vmatpush1.bf16.msra.mxu0 %v283
    %583 = vmatprep.subr.bf16.mxu0 %v288
    %584 = vmatpush1.bf16.msra.mxu0 %v287
    %585 = vmatprep.subr.bf16.mxu0 %v292
    %586 = vmatpush1.bf16.msra.mxu0 %v291
    %587 = vmatprep.subr.bf16.mxu0 0
    %588 = vmatpush1.bf16.msra.mxu0 0
    %589 = vmatprep.subr.bf16.mxu0 0
    %590 = vmatpush1.bf16.msra.mxu0 0
    %591 = vmatprep.subr.bf16.mxu0 0
    %592 = vmatpush1.bf16.msra.mxu0 0
    %593 = vmatprep.subr.bf16.mxu0 0
    %594 = vmatpush1.bf16.msra.mxu0 0
    %595 = vmatprep.subr.bf16.mxu0 0
    %596 = vmatpush1.bf16.msra.mxu0 0
    %597 = vmatprep.subr.bf16.mxu0 0
    %598 = vmatpush1.bf16.msra.mxu0 0
    %599 = vmatprep.subr.bf16.mxu0 0
    %600 = vmatpush1.bf16.msra.mxu0 0
    %601 = vmatprep.subr.bf16.mxu0 0
    %602 = vmatpush1.bf16.msra.mxu0 0
    %603 = vmatprep.mubr.bf16.mxu0 0
    %604 = vmatmul.mubr.bf16.gmra.mrb[0].mxu0 %v529
    %v605 = vpop.f32.mrb[0].mxu0
    %v606 = vadd.f32 %v117, %v605
    %v607 = vpop.f32.mrb[0].mxu0
    %v608 = vadd.f32 %v121, %v607
    %v609 = vpop.f32.mrb[0].mxu0
    %v610 = vpop.f32.mrb[0].mxu0
    %611 = vdwg.mxu0
    %v612 = vxor.u32 %v565, 2147483648
    %v613 = vxor.u32 %v567, 2147483648
    %v614 = vxor.u32 %v606, 2147483648
    %v615 = vmul.f32 %v612, 1.442695
    %v616 = vpow.pop %v615
    %v617 = vmul.f32 %v613, 1.442695
    %v618 = vpow.pop %v617
    %v619 = vmul.f32 %v614, 1.442695
    %v620 = vpow.pop %v619
    %v621 = vadd.f32 %v616, 1.0
    %v622 = vadd.f32 %v618, 1.0
    %v623 = vadd.f32 %v620, 1.0
    %v624 = vrcp.pop %v621
    %v625 = vmul.f32 1.0, %v624
    %v626 = vrcp.pop %v622
    %v627 = vmul.f32 1.0, %v626
    %v628 = vrcp.pop %v623
    %v629 = vmul.f32 1.0, %v628
    %v630 = vtanh.pop %v608
    %v631 = vmul.f32 %v428, %v625
    %v632 = vmul.f32 %v627, %v630
    %v633 = vadd.f32 %v631, %v632
    %v634 = vtanh.pop %v633
    %v635 = vmul.f32 %v629, %v634
    %v637 = vcombine.high %v635, %v635
    %v639 = vunpack.c.l.s4 1966171168
    %v640 = vunpack.c.0.s8 %v639
    %v641 = vlaneseq
    %v642 = vshrl.u32 %v641, 7
    %v643 = vsub.s32 %v640, %v642
    %v644 = vrot.slane %v635, %v643
    %v646 = vunpack.c.l.s4 1966171168
    %v647 = vunpack.c.0.s8 %v646
    %v648 = vlaneseq
    %v649 = vshrl.u32 %v648, 7
    %v650 = vsub.s32 %v647, %v649
    %v651 = vrot.slane %v637, %v650
    %v652 = vcombine.high %v644, %v644
    %v653 = vcombine.high %v651, %v651
    %v655 = vunpack.c.l.s4 1966171168
    %v656 = vunpack.c.0.s8 %v655
    %v657 = vlaneseq
    %v658 = vshrl.u32 %v657, 7
    %v659 = vsub.s32 %v656, %v658
    %v660 = vrot.slane %v644, %v659
    %v662 = vunpack.c.l.s4 1966171168
    %v663 = vunpack.c.0.s8 %v662
    %v664 = vlaneseq
    %v665 = vshrl.u32 %v664, 7
    %v666 = vsub.s32 %v663, %v665
    %v667 = vrot.slane %v651, %v666
    %v669 = vunpack.c.l.s4 1966171168
    %v670 = vunpack.c.0.s8 %v669
    %v671 = vlaneseq
    %v672 = vshrl.u32 %v671, 7
    %v673 = vsub.s32 %v670, %v672
    %v674 = vrot.slane %v652, %v673
    %v676 = vunpack.c.l.s4 1966171168
    %v677 = vunpack.c.0.s8 %v676
    %v678 = vlaneseq
    %v679 = vshrl.u32 %v678, 7
    %v680 = vsub.s32 %v677, %v679
    %v681 = vrot.slane %v653, %v680
    %v682 = vcombine.high %v660, %v660
    %v683 = vcombine.high %v667, %v667
    %v684 = vcombine.high %v674, %v674
    %v685 = vcombine.high %v681, %v681
    %694 = vst [vmem:[#allocation7 + $0x1] sm:$0x1] %v660
    %695 = vst [vmem:[#allocation7 + $0x9] sm:$0x1] %v674
    %696 = vst [vmem:[#allocation7 + $0x11] sm:$0x1] %v682
    %697 = vst [vmem:[#allocation7 + $0x19] sm:$0x1] %v684
    %698 = vst [vmem:[#allocation7 + $0x21] sm:$0x1] %v667
    %699 = vst [vmem:[#allocation7 + $0x29] sm:$0x1] %v681
    %700 = vst [vmem:[#allocation7 + $0x31] sm:$0x1] %v683
    %701 = vst [vmem:[#allocation7 + $0x39] sm:$0x1] %v685
    %v702 = vld [vmem:[#allocation2 + $0x2] sm:$0x1]
    %v703 = vld [vmem:[#allocation2 + $0xa] sm:$0x1]
    %v704 = vld [vmem:[#allocation2 + $0x12] sm:$0x1]
    %v705 = vld [vmem:[#allocation2 + $0x1a] sm:$0x1]
    %v706 = vld [vmem:[#allocation2 + $0x22] sm:$0x1]
    %v707 = vld [vmem:[#allocation2 + $0x2a] sm:$0x1]
    %v708 = vld [vmem:[#allocation2 + $0x32] sm:$0x1]
    %v709 = vld [vmem:[#allocation2 + $0x3a] sm:$0x1]
    %v718 = vrot.slane %v703, 7
    %v719 = vsel %vm143, %v718, %v702
    %v720 = vrot.slane %v704, 6
    %v721 = vsel %vm146, %v720, %v719
    %v722 = vrot.slane %v705, 5
    %v723 = vsel %vm149, %v722, %v721
    %v724 = vrot.slane %v706, 4
    %v725 = vsel %vm152, %v724, %v723
    %v726 = vrot.slane %v707, 3
    %v727 = vsel %vm155, %v726, %v725
    %v728 = vrot.slane %v708, 2
    %v729 = vsel %vm158, %v728, %v727
    %v730 = vrot.slane %v709, 1
    %v731 = vsel %vm161, %v730, %v729
    %v733 = vadd.f32 %v635, %v731
    %v734 = vpack.c.bf16 %v733, %v733
    %735 = vmatprep.subr.bf16.mxu0 %v262
    %736 = vmatpush1.bf16.msra.mxu0 %v261
    %737 = vmatprep.subr.bf16.mxu0 %v266
    %738 = vmatpush1.bf16.msra.mxu0 %v265
    %739 = vmatprep.subr.bf16.mxu0 %v270
    %740 = vmatpush1.bf16.msra.mxu0 %v269
    %741 = vmatprep.subr.bf16.mxu0 %v274
    %742 = vmatpush1.bf16.msra.mxu0 %v273
    %743 = vmatprep.subr.bf16.mxu0 %v278
    %744 = vmatpush1.bf16.msra.mxu0 %v277
    %745 = vmatprep.subr.bf16.mxu0 %v282
    %746 = vmatpush1.bf16.msra.mxu0 %v281
    %747 = vmatprep.subr.bf16.mxu0 %v286
    %748 = vmatpush1.bf16.msra.mxu0 %v285
    %749 = vmatprep.subr.bf16.mxu0 %v290
    %750 = vmatpush1.bf16.msra.mxu0 %v289
    %751 = vmatprep.subr.bf16.mxu0 0
    %752 = vmatpush1.bf16.msra.mxu0 0
    %753 = vmatprep.subr.bf16.mxu0 0
    %754 = vmatpush1.bf16.msra.mxu0 0
    %755 = vmatprep.subr.bf16.mxu0 0
    %756 = vmatpush1.bf16.msra.mxu0 0
    %757 = vmatprep.subr.bf16.mxu0 0
    %758 = vmatpush1.bf16.msra.mxu0 0
    %759 = vmatprep.subr.bf16.mxu0 0
    %760 = vmatpush1.bf16.msra.mxu0 0
    %761 = vmatprep.subr.bf16.mxu0 0
    %762 = vmatpush1.bf16.msra.mxu0 0
    %763 = vmatprep.subr.bf16.mxu0 0
    %764 = vmatpush1.bf16.msra.mxu0 0
    %765 = vmatprep.subr.bf16.mxu0 0
    %766 = vmatpush1.bf16.msra.mxu0 0
    %767 = vmatprep.mubr.bf16.mxu0 0
    %768 = vmatmul.mubr.bf16.gmra.mrb[0].mxu0 %v734
    %v769 = vpop.f32.mrb[0].mxu0
    %v770 = vadd.f32 %v109, %v769
    %v771 = vpop.f32.mrb[0].mxu0
    %v772 = vadd.f32 %v113, %v771
    %v773 = vpop.f32.mrb[0].mxu0
    %v774 = vpop.f32.mrb[0].mxu0
    %775 = vdwg.mxu0
    %776 = vmatprep.subr.bf16.mxu0 %v264
    %777 = vmatpush1.bf16.msra.mxu0 %v263
    %778 = vmatprep.subr.bf16.mxu0 %v268
    %779 = vmatpush1.bf16.msra.mxu0 %v267
    %780 = vmatprep.subr.bf16.mxu0 %v272
    %781 = vmatpush1.bf16.msra.mxu0 %v271
    %782 = vmatprep.subr.bf16.mxu0 %v276
    %783 = vmatpush1.bf16.msra.mxu0 %v275
    %784 = vmatprep.subr.bf16.mxu0 %v280
    %785 = vmatpush1.bf16.msra.mxu0 %v279
    %786 = vmatprep.subr.bf16.mxu0 %v284
    %787 = vmatpush1.bf16.msra.mxu0 %v283
    %788 = vmatprep.subr.bf16.mxu0 %v288
    %789 = vmatpush1.bf16.msra.mxu0 %v287
    %790 = vmatprep.subr.bf16.mxu0 %v292
    %791 = vmatpush1.bf16.msra.mxu0 %v291
    %792 = vmatprep.subr.bf16.mxu0 0
    %793 = vmatpush1.bf16.msra.mxu0 0
    %794 = vmatprep.subr.bf16.mxu0 0
    %795 = vmatpush1.bf16.msra.mxu0 0
    %796 = vmatprep.subr.bf16.mxu0 0
    %797 = vmatpush1.bf16.msra.mxu0 0
    %798 = vmatprep.subr.bf16.mxu0 0
    %799 = vmatpush1.bf16.msra.mxu0 0
    %800 = vmatprep.subr.bf16.mxu0 0
    %801 = vmatpush1.bf16.msra.mxu0 0
    %802 = vmatprep.subr.bf16.mxu0 0
    %803 = vmatpush1.bf16.msra.mxu0 0
    %804 = vmatprep.subr.bf16.mxu0 0
    %805 = vmatpush1.bf16.msra.mxu0 0
    %806 = vmatprep.subr.bf16.mxu0 0
    %807 = vmatpush1.bf16.msra.mxu0 0
    %808 = vmatprep.mubr.bf16.mxu0 0
    %809 = vmatmul.mubr.bf16.gmra.mrb[0].mxu0 %v734
    %v810 = vpop.f32.mrb[0].mxu0
    %v811 = vadd.f32 %v117, %v810
    %v812 = vpop.f32.mrb[0].mxu0
    %v813 = vadd.f32 %v121, %v812
    %v814 = vpop.f32.mrb[0].mxu0
    %v815 = vpop.f32.mrb[0].mxu0
    %816 = vdwg.mxu0
    %v817 = vxor.u32 %v770, 2147483648
    %v818 = vxor.u32 %v772, 2147483648
    %v819 = vxor.u32 %v811, 2147483648
    %v820 = vmul.f32 %v817, 1.442695
    %v821 = vpow.pop %v820
    %v822 = vmul.f32 %v818, 1.442695
    %v823 = vpow.pop %v822
    %v824 = vmul.f32 %v819, 1.442695
    %v825 = vpow.pop %v824
    %v826 = vadd.f32 %v821, 1.0
    %v827 = vadd.f32 %v823, 1.0
    %v828 = vadd.f32 %v825, 1.0
    %v829 = vrcp.pop %v826
    %v830 = vmul.f32 1.0, %v829
    %v831 = vrcp.pop %v827
    %v832 = vmul.f32 1.0, %v831
    %v833 = vrcp.pop %v828
    %v834 = vmul.f32 1.0, %v833
    %v835 = vtanh.pop %v813
    %v836 = vmul.f32 %v633, %v830
    %v837 = vmul.f32 %v832, %v835
    %v838 = vadd.f32 %v836, %v837
    %v839 = vtanh.pop %v838
    %v840 = vmul.f32 %v834, %v839
    %v842 = vcombine.high %v840, %v840
    %v844 = vunpack.c.l.s4 1966171168
    %v845 = vunpack.c.0.s8 %v844
    %v846 = vlaneseq
    %v847 = vshrl.u32 %v846, 7
    %v848 = vsub.s32 %v845, %v847
    %v849 = vrot.slane %v840, %v848
    %v851 = vunpack.c.l.s4 1966171168
    %v852 = vunpack.c.0.s8 %v851
    %v853 = vlaneseq
    %v854 = vshrl.u32 %v853, 7
    %v855 = vsub.s32 %v852, %v854
    %v856 = vrot.slane %v842, %v855
    %v857 = vcombine.high %v849, %v849
    %v858 = vcombine.high %v856, %v856
    %v860 = vunpack.c.l.s4 1966171168
    %v861 = vunpack.c.0.s8 %v860
    %v862 = vlaneseq
    %v863 = vshrl.u32 %v862, 7
    %v864 = vsub.s32 %v861, %v863
    %v865 = vrot.slane %v849, %v864
    %v867 = vunpack.c.l.s4 1966171168
    %v868 = vunpack.c.0.s8 %v867
    %v869 = vlaneseq
    %v870 = vshrl.u32 %v869, 7
    %v871 = vsub.s32 %v868, %v870
    %v872 = vrot.slane %v856, %v871
    %v874 = vunpack.c.l.s4 1966171168
    %v875 = vunpack.c.0.s8 %v874
    %v876 = vlaneseq
    %v877 = vshrl.u32 %v876, 7
    %v878 = vsub.s32 %v875, %v877
    %v879 = vrot.slane %v857, %v878
    %v881 = vunpack.c.l.s4 1966171168
    %v882 = vunpack.c.0.s8 %v881
    %v883 = vlaneseq
    %v884 = vshrl.u32 %v883, 7
    %v885 = vsub.s32 %v882, %v884
    %v886 = vrot.slane %v858, %v885
    %v887 = vcombine.high %v865, %v865
    %v888 = vcombine.high %v872, %v872
    %v889 = vcombine.high %v879, %v879
    %v890 = vcombine.high %v886, %v886
    %899 = vst [vmem:[#allocation7 + $0x2] sm:$0x1] %v865
    %900 = vst [vmem:[#allocation7 + $0xa] sm:$0x1] %v879
    %901 = vst [vmem:[#allocation7 + $0x12] sm:$0x1] %v887
    %902 = vst [vmem:[#allocation7 + $0x1a] sm:$0x1] %v889
    %903 = vst [vmem:[#allocation7 + $0x22] sm:$0x1] %v872
    %904 = vst [vmem:[#allocation7 + $0x2a] sm:$0x1] %v886
    %905 = vst [vmem:[#allocation7 + $0x32] sm:$0x1] %v888
    %906 = vst [vmem:[#allocation7 + $0x3a] sm:$0x1] %v890
    %v907 = vld [vmem:[#allocation2 + $0x3] sm:$0x1]
    %v908 = vld [vmem:[#allocation2 + $0xb] sm:$0x1]
    %v909 = vld [vmem:[#allocation2 + $0x13] sm:$0x1]
    %v910 = vld [vmem:[#allocation2 + $0x1b] sm:$0x1]
    %v911 = vld [vmem:[#allocation2 + $0x23] sm:$0x1]
    %v912 = vld [vmem:[#allocation2 + $0x2b] sm:$0x1]
    %v913 = vld [vmem:[#allocation2 + $0x33] sm:$0x1]
    %v914 = vld [vmem:[#allocation2 + $0x3b] sm:$0x1]
    %v923 = vrot.slane %v908, 7
    %v924 = vsel %vm143, %v923, %v907
    %v925 = vrot.slane %v909, 6
    %v926 = vsel %vm146, %v925, %v924
    %v927 = vrot.slane %v910, 5
    %v928 = vsel %vm149, %v927, %v926
    %v929 = vrot.slane %v911, 4
    %v930 = vsel %vm152, %v929, %v928
    %v931 = vrot.slane %v912, 3
    %v932 = vsel %vm155, %v931, %v930
    %v933 = vrot.slane %v913, 2
    %v934 = vsel %vm158, %v933, %v932
    %v935 = vrot.slane %v914, 1
    %v936 = vsel %vm161, %v935, %v934
    %v938 = vadd.f32 %v840, %v936
    %v939 = vpack.c.bf16 %v938, %v938
    %940 = vmatprep.subr.bf16.mxu0 %v262
    %941 = vmatpush1.bf16.msra.mxu0 %v261
    %942 = vmatprep.subr.bf16.mxu0 %v266
    %943 = vmatpush1.bf16.msra.mxu0 %v265
    %944 = vmatprep.subr.bf16.mxu0 %v270
    %945 = vmatpush1.bf16.msra.mxu0 %v269
    %946 = vmatprep.subr.bf16.mxu0 %v274
    %947 = vmatpush1.bf16.msra.mxu0 %v273
    %948 = vmatprep.subr.bf16.mxu0 %v278
    %949 = vmatpush1.bf16.msra.mxu0 %v277
    %950 = vmatprep.subr.bf16.mxu0 %v282
    %951 = vmatpush1.bf16.msra.mxu0 %v281
    %952 = vmatprep.subr.bf16.mxu0 %v286
    %953 = vmatpush1.bf16.msra.mxu0 %v285
    %954 = vmatprep.subr.bf16.mxu0 %v290
    %955 = vmatpush1.bf16.msra.mxu0 %v289
    %956 = vmatprep.subr.bf16.mxu0 0
    %957 = vmatpush1.bf16.msra.mxu0 0
    %958 = vmatprep.subr.bf16.mxu0 0
    %959 = vmatpush1.bf16.msra.mxu0 0
    %960 = vmatprep.subr.bf16.mxu0 0
    %961 = vmatpush1.bf16.msra.mxu0 0
    %962 = vmatprep.subr.bf16.mxu0 0
    %963 = vmatpush1.bf16.msra.mxu0 0
    %964 = vmatprep.subr.bf16.mxu0 0
    %965 = vmatpush1.bf16.msra.mxu0 0
    %966 = vmatprep.subr.bf16.mxu0 0
    %967 = vmatpush1.bf16.msra.mxu0 0
    %968 = vmatprep.subr.bf16.mxu0 0
    %969 = vmatpush1.bf16.msra.mxu0 0
    %970 = vmatprep.subr.bf16.mxu0 0
    %971 = vmatpush1.bf16.msra.mxu0 0
    %972 = vmatprep.mubr.bf16.mxu0 0
    %973 = vmatmul.mubr.bf16.gmra.mrb[0].mxu0 %v939
    %v974 = vpop.f32.mrb[0].mxu0
    %v975 = vadd.f32 %v109, %v974
    %v976 = vpop.f32.mrb[0].mxu0
    %v977 = vadd.f32 %v113, %v976
    %v978 = vpop.f32.mrb[0].mxu0
    %v979 = vpop.f32.mrb[0].mxu0
    %980 = vdwg.mxu0
    %981 = vmatprep.subr.bf16.mxu0 %v264
    %982 = vmatpush1.bf16.msra.mxu0 %v263
    %983 = vmatprep.subr.bf16.mxu0 %v268
    %984 = vmatpush1.bf16.msra.mxu0 %v267
    %985 = vmatprep.subr.bf16.mxu0 %v272
    %986 = vmatpush1.bf16.msra.mxu0 %v271
    %987 = vmatprep.subr.bf16.mxu0 %v276
    %988 = vmatpush1.bf16.msra.mxu0 %v275
    %989 = vmatprep.subr.bf16.mxu0 %v280
    %990 = vmatpush1.bf16.msra.mxu0 %v279
    %991 = vmatprep.subr.bf16.mxu0 %v284
    %992 = vmatpush1.bf16.msra.mxu0 %v283
    %993 = vmatprep.subr.bf16.mxu0 %v288
    %994 = vmatpush1.bf16.msra.mxu0 %v287
    %995 = vmatprep.subr.bf16.mxu0 %v292
    %996 = vmatpush1.bf16.msra.mxu0 %v291
    %997 = vmatprep.subr.bf16.mxu0 0
    %998 = vmatpush1.bf16.msra.mxu0 0
    %999 = vmatprep.subr.bf16.mxu0 0
    %1000 = vmatpush1.bf16.msra.mxu0 0
    %1001 = vmatprep.subr.bf16.mxu0 0
    %1002 = vmatpush1.bf16.msra.mxu0 0
    %1003 = vmatprep.subr.bf16.mxu0 0
    %1004 = vmatpush1.bf16.msra.mxu0 0
    %1005 = vmatprep.subr.bf16.mxu0 0
    %1006 = vmatpush1.bf16.msra.mxu0 0
    %1007 = vmatprep.subr.bf16.mxu0 0
    %1008 = vmatpush1.bf16.msra.mxu0 0
    %1009 = vmatprep.subr.bf16.mxu0 0
    %1010 = vmatpush1.bf16.msra.mxu0 0
    %1011 = vmatprep.subr.bf16.mxu0 0
    %1012 = vmatpush1.bf16.msra.mxu0 0
    %1013 = vmatprep.mubr.bf16.mxu0 0
    %1014 = vmatmul.mubr.bf16.gmra.mrb[0].mxu0 %v939
    %v1015 = vpop.f32.mrb[0].mxu0
    %v1016 = vadd.f32 %v117, %v1015
    %v1017 = vpop.f32.mrb[0].mxu0
    %v1018 = vadd.f32 %v121, %v1017
    %v1019 = vpop.f32.mrb[0].mxu0
    %v1020 = vpop.f32.mrb[0].mxu0
    %1021 = vdwg.mxu0
    %v1022 = vxor.u32 %v975, 2147483648
    %v1023 = vxor.u32 %v977, 2147483648
    %v1024 = vxor.u32 %v1016, 2147483648
    %v1025 = vmul.f32 %v1022, 1.442695
    %v1026 = vpow.pop %v1025
    %v1027 = vmul.f32 %v1023, 1.442695
    %v1028 = vpow.pop %v1027
    %v1029 = vmul.f32 %v1024, 1.442695
    %v1030 = vpow.pop %v1029
    %v1031 = vadd.f32 %v1026, 1.0
    %v1032 = vadd.f32 %v1028, 1.0
    %v1033 = vadd.f32 %v1030, 1.0
    %v1034 = vrcp.pop %v1031
    %v1035 = vmul.f32 1.0, %v1034
    %v1036 = vrcp.pop %v1032
    %v1037 = vmul.f32 1.0, %v1036
    %v1038 = vrcp.pop %v1033
    %v1039 = vmul.f32 1.0, %v1038
    %v1040 = vtanh.pop %v1018
    %v1041 = vmul.f32 %v838, %v1035
    %v1042 = vmul.f32 %v1037, %v1040
    %v1043 = vadd.f32 %v1041, %v1042
    %v1044 = vtanh.pop %v1043
    %v1045 = vmul.f32 %v1039, %v1044
    %v1047 = vcombine.high %v1045, %v1045
    %v1049 = vunpack.c.l.s4 1966171168
    %v1050 = vunpack.c.0.s8 %v1049
    %v1051 = vlaneseq
    %v1052 = vshrl.u32 %v1051, 7
    %v1053 = vsub.s32 %v1050, %v1052
    %v1054 = vrot.slane %v1045, %v1053
    %v1056 = vunpack.c.l.s4 1966171168
    %v1057 = vunpack.c.0.s8 %v1056
    %v1058 = vlaneseq
    %v1059 = vshrl.u32 %v1058, 7
    %v1060 = vsub.s32 %v1057, %v1059
    %v1061 = vrot.slane %v1047, %v1060
    %v1062 = vcombine.high %v1054, %v1054
    %v1063 = vcombine.high %v1061, %v1061
    %v1065 = vunpack.c.l.s4 1966171168
    %v1066 = vunpack.c.0.s8 %v1065
    %v1067 = vlaneseq
    %v1068 = vshrl.u32 %v1067, 7
    %v1069 = vsub.s32 %v1066, %v1068
    %v1070 = vrot.slane %v1054, %v1069
    %v1072 = vunpack.c.l.s4 1966171168
    %v1073 = vunpack.c.0.s8 %v1072
    %v1074 = vlaneseq
    %v1075 = vshrl.u32 %v1074, 7
    %v1076 = vsub.s32 %v1073, %v1075
    %v1077 = vrot.slane %v1061, %v1076
    %v1079 = vunpack.c.l.s4 1966171168
    %v1080 = vunpack.c.0.s8 %v1079
    %v1081 = vlaneseq
    %v1082 = vshrl.u32 %v1081, 7
    %v1083 = vsub.s32 %v1080, %v1082
    %v1084 = vrot.slane %v1062, %v1083
    %v1086 = vunpack.c.l.s4 1966171168
    %v1087 = vunpack.c.0.s8 %v1086
    %v1088 = vlaneseq
    %v1089 = vshrl.u32 %v1088, 7
    %v1090 = vsub.s32 %v1087, %v1089
    %v1091 = vrot.slane %v1063, %v1090
    %v1092 = vcombine.high %v1070, %v1070
    %v1093 = vcombine.high %v1077, %v1077
    %v1094 = vcombine.high %v1084, %v1084
    %v1095 = vcombine.high %v1091, %v1091
    %1104 = vst [vmem:[#allocation7 + $0x3] sm:$0x1] %v1070
    %1105 = vst [vmem:[#allocation7 + $0xb] sm:$0x1] %v1084
    %1106 = vst [vmem:[#allocation7 + $0x13] sm:$0x1] %v1092
    %1107 = vst [vmem:[#allocation7 + $0x1b] sm:$0x1] %v1094
    %1108 = vst [vmem:[#allocation7 + $0x23] sm:$0x1] %v1077
    %1109 = vst [vmem:[#allocation7 + $0x2b] sm:$0x1] %v1091
    %1110 = vst [vmem:[#allocation7 + $0x33] sm:$0x1] %v1093
    %1111 = vst [vmem:[#allocation7 + $0x3b] sm:$0x1] %v1095
    %v1112 = vld [vmem:[#allocation2 + $0x4] sm:$0x1]
    %v1113 = vld [vmem:[#allocation2 + $0xc] sm:$0x1]
    %v1114 = vld [vmem:[#allocation2 + $0x14] sm:$0x1]
    %v1115 = vld [vmem:[#allocation2 + $0x1c] sm:$0x1]
    %v1116 = vld [vmem:[#allocation2 + $0x24] sm:$0x1]
    %v1117 = vld [vmem:[#allocation2 + $0x2c] sm:$0x1]
    %v1118 = vld [vmem:[#allocation2 + $0x34] sm:$0x1]
    %v1119 = vld [vmem:[#allocation2 + $0x3c] sm:$0x1]
    %v1128 = vrot.slane %v1113, 7
    %v1129 = vsel %vm143, %v1128, %v1112
    %v1130 = vrot.slane %v1114, 6
    %v1131 = vsel %vm146, %v1130, %v1129
    %v1132 = vrot.slane %v1115, 5
    %v1133 = vsel %vm149, %v1132, %v1131
    %v1134 = vrot.slane %v1116, 4
    %v1135 = vsel %vm152, %v1134, %v1133
    %v1136 = vrot.slane %v1117, 3
    %v1137 = vsel %vm155, %v1136, %v1135
    %v1138 = vrot.slane %v1118, 2
    %v1139 = vsel %vm158, %v1138, %v1137
    %v1140 = vrot.slane %v1119, 1
    %v1141 = vsel %vm161, %v1140, %v1139
    %v1143 = vadd.f32 %v1045, %v1141
    %v1144 = vpack.c.bf16 %v1143, %v1143
    %1145 = vmatprep.subr.bf16.mxu0 %v262
    %1146 = vmatpush1.bf16.msra.mxu0 %v261
    %1147 = vmatprep.subr.bf16.mxu0 %v266
    %1148 = vmatpush1.bf16.msra.mxu0 %v265
    %1149 = vmatprep.subr.bf16.mxu0 %v270
    %1150 = vmatpush1.bf16.msra.mxu0 %v269
    %1151 = vmatprep.subr.bf16.mxu0 %v274
    %1152 = vmatpush1.bf16.msra.mxu0 %v273
    %1153 = vmatprep.subr.bf16.mxu0 %v278
    %1154 = vmatpush1.bf16.msra.mxu0 %v277
    %1155 = vmatprep.subr.bf16.mxu0 %v282
    %1156 = vmatpush1.bf16.msra.mxu0 %v281
    %1157 = vmatprep.subr.bf16.mxu0 %v286
    %1158 = vmatpush1.bf16.msra.mxu0 %v285
    %1159 = vmatprep.subr.bf16.mxu0 %v290
    %1160 = vmatpush1.bf16.msra.mxu0 %v289
    %1161 = vmatprep.subr.bf16.mxu0 0
    %1162 = vmatpush1.bf16.msra.mxu0 0
    %1163 = vmatprep.subr.bf16.mxu0 0
    %1164 = vmatpush1.bf16.msra.mxu0 0
    %1165 = vmatprep.subr.bf16.mxu0 0
    %1166 = vmatpush1.bf16.msra.mxu0 0
    %1167 = vmatprep.subr.bf16.mxu0 0
    %1168 = vmatpush1.bf16.msra.mxu0 0
    %1169 = vmatprep.subr.bf16.mxu0 0
    %1170 = vmatpush1.bf16.msra.mxu0 0
    %1171 = vmatprep.subr.bf16.mxu0 0
    %1172 = vmatpush1.bf16.msra.mxu0 0
    %1173 = vmatprep.subr.bf16.mxu0 0
    %1174 = vmatpush1.bf16.msra.mxu0 0
    %1175 = vmatprep.subr.bf16.mxu0 0
    %1176 = vmatpush1.bf16.msra.mxu0 0
    %1177 = vmatprep.mubr.bf16.mxu0 0
    %1178 = vmatmul.mubr.bf16.gmra.mrb[0].mxu0 %v1144
    %v1179 = vpop.f32.mrb[0].mxu0
    %v1180 = vadd.f32 %v109, %v1179
    %v1181 = vpop.f32.mrb[0].mxu0
    %v1182 = vadd.f32 %v113, %v1181
    %v1183 = vpop.f32.mrb[0].mxu0
    %v1184 = vpop.f32.mrb[0].mxu0
    %1185 = vdwg.mxu0
    %1186 = vmatprep.subr.bf16.mxu0 %v264
    %1187 = vmatpush1.bf16.msra.mxu0 %v263
    %1188 = vmatprep.subr.bf16.mxu0 %v268
    %1189 = vmatpush1.bf16.msra.mxu0 %v267
    %1190 = vmatprep.subr.bf16.mxu0 %v272
    %1191 = vmatpush1.bf16.msra.mxu0 %v271
    %1192 = vmatprep.subr.bf16.mxu0 %v276
    %1193 = vmatpush1.bf16.msra.mxu0 %v275
    %1194 = vmatprep.subr.bf16.mxu0 %v280
    %1195 = vmatpush1.bf16.msra.mxu0 %v279
    %1196 = vmatprep.subr.bf16.mxu0 %v284
    %1197 = vmatpush1.bf16.msra.mxu0 %v283
    %1198 = vmatprep.subr.bf16.mxu0 %v288
    %1199 = vmatpush1.bf16.msra.mxu0 %v287
    %1200 = vmatprep.subr.bf16.mxu0 %v292
    %1201 = vmatpush1.bf16.msra.mxu0 %v291
    %1202 = vmatprep.subr.bf16.mxu0 0
    %1203 = vmatpush1.bf16.msra.mxu0 0
    %1204 = vmatprep.subr.bf16.mxu0 0
    %1205 = vmatpush1.bf16.msra.mxu0 0
    %1206 = vmatprep.subr.bf16.mxu0 0
    %1207 = vmatpush1.bf16.msra.mxu0 0
    %1208 = vmatprep.subr.bf16.mxu0 0
    %1209 = vmatpush1.bf16.msra.mxu0 0
    %1210 = vmatprep.subr.bf16.mxu0 0
    %1211 = vmatpush1.bf16.msra.mxu0 0
    %1212 = vmatprep.subr.bf16.mxu0 0
    %1213 = vmatpush1.bf16.msra.mxu0 0
    %1214 = vmatprep.subr.bf16.mxu0 0
    %1215 = vmatpush1.bf16.msra.mxu0 0
    %1216 = vmatprep.subr.bf16.mxu0 0
    %1217 = vmatpush1.bf16.msra.mxu0 0
    %1218 = vmatprep.mubr.bf16.mxu0 0
    %1219 = vmatmul.mubr.bf16.gmra.mrb[0].mxu0 %v1144
    %v1220 = vpop.f32.mrb[0].mxu0
    %v1221 = vadd.f32 %v117, %v1220
    %v1222 = vpop.f32.mrb[0].mxu0
    %v1223 = vadd.f32 %v121, %v1222
    %v1224 = vpop.f32.mrb[0].mxu0
    %v1225 = vpop.f32.mrb[0].mxu0
    %1226 = vdwg.mxu0
    %v1227 = vxor.u32 %v1180, 2147483648
    %v1228 = vxor.u32 %v1182, 2147483648
    %v1229 = vxor.u32 %v1221, 2147483648
    %v1230 = vmul.f32 %v1227, 1.442695
    %v1231 = vpow.pop %v1230
    %v1232 = vmul.f32 %v1228, 1.442695
    %v1233 = vpow.pop %v1232
    %v1234 = vmul.f32 %v1229, 1.442695
    %v1235 = vpow.pop %v1234
    %v1236 = vadd.f32 %v1231, 1.0
    %v1237 = vadd.f32 %v1233, 1.0
    %v1238 = vadd.f32 %v1235, 1.0
    %v1239 = vrcp.pop %v1236
    %v1240 = vmul.f32 1.0, %v1239
    %v1241 = vrcp.pop %v1237
    %v1242 = vmul.f32 1.0, %v1241
    %v1243 = vrcp.pop %v1238
    %v1244 = vmul.f32 1.0, %v1243
    %v1245 = vtanh.pop %v1223
    %v1246 = vmul.f32 %v1043, %v1240
    %v1247 = vmul.f32 %v1242, %v1245
    %v1248 = vadd.f32 %v1246, %v1247
    %v1249 = vtanh.pop %v1248
    %v1250 = vmul.f32 %v1244, %v1249
    %v1252 = vcombine.high %v1250, %v1250
    %v1254 = vunpack.c.l.s4 1966171168
    %v1255 = vunpack.c.0.s8 %v1254
    %v1256 = vlaneseq
    %v1257 = vshrl.u32 %v1256, 7
    %v1258 = vsub.s32 %v1255, %v1257
    %v1259 = vrot.slane %v1250, %v1258
    %v1261 = vunpack.c.l.s4 1966171168
    %v1262 = vunpack.c.0.s8 %v1261
    %v1263 = vlaneseq
    %v1264 = vshrl.u32 %v1263, 7
    %v1265 = vsub.s32 %v1262, %v1264
    %v1266 = vrot.slane %v1252, %v1265
    %v1267 = vcombine.high %v1259, %v1259
    %v1268 = vcombine.high %v1266, %v1266
    %v1270 = vunpack.c.l.s4 1966171168
    %v1271 = vunpack.c.0.s8 %v1270
    %v1272 = vlaneseq
    %v1273 = vshrl.u32 %v1272, 7
    %v1274 = vsub.s32 %v1271, %v1273
    %v1275 = vrot.slane %v1259, %v1274
    %v1277 = vunpack.c.l.s4 1966171168
    %v1278 = vunpack.c.0.s8 %v1277
    %v1279 = vlaneseq
    %v1280 = vshrl.u32 %v1279, 7
    %v1281 = vsub.s32 %v1278, %v1280
    %v1282 = vrot.slane %v1266, %v1281
    %v1284 = vunpack.c.l.s4 1966171168
    %v1285 = vunpack.c.0.s8 %v1284
    %v1286 = vlaneseq
    %v1287 = vshrl.u32 %v1286, 7
    %v1288 = vsub.s32 %v1285, %v1287
    %v1289 = vrot.slane %v1267, %v1288
    %v1291 = vunpack.c.l.s4 1966171168
    %v1292 = vunpack.c.0.s8 %v1291
    %v1293 = vlaneseq
    %v1294 = vshrl.u32 %v1293, 7
    %v1295 = vsub.s32 %v1292, %v1294
    %v1296 = vrot.slane %v1268, %v1295
    %v1297 = vcombine.high %v1275, %v1275
    %v1298 = vcombine.high %v1282, %v1282
    %v1299 = vcombine.high %v1289, %v1289
    %v1300 = vcombine.high %v1296, %v1296
    %1309 = vst [vmem:[#allocation7 + $0x4] sm:$0x1] %v1275
    %1310 = vst [vmem:[#allocation7 + $0xc] sm:$0x1] %v1289
    %1311 = vst [vmem:[#allocation7 + $0x14] sm:$0x1] %v1297
    %1312 = vst [vmem:[#allocation7 + $0x1c] sm:$0x1] %v1299
    %1313 = vst [vmem:[#allocation7 + $0x24] sm:$0x1] %v1282
    %1314 = vst [vmem:[#allocation7 + $0x2c] sm:$0x1] %v1296
    %1315 = vst [vmem:[#allocation7 + $0x34] sm:$0x1] %v1298
    %1316 = vst [vmem:[#allocation7 + $0x3c] sm:$0x1] %v1300
    %v1317 = vld [vmem:[#allocation2 + $0x5] sm:$0x1]
    %v1318 = vld [vmem:[#allocation2 + $0xd] sm:$0x1]
    %v1319 = vld [vmem:[#allocation2 + $0x15] sm:$0x1]
    %v1320 = vld [vmem:[#allocation2 + $0x1d] sm:$0x1]
    %v1321 = vld [vmem:[#allocation2 + $0x25] sm:$0x1]
    %v1322 = vld [vmem:[#allocation2 + $0x2d] sm:$0x1]
    %v1323 = vld [vmem:[#allocation2 + $0x35] sm:$0x1]
    %v1324 = vld [vmem:[#allocation2 + $0x3d] sm:$0x1]
    %v1333 = vrot.slane %v1318, 7
    %v1334 = vsel %vm143, %v1333, %v1317
    %v1335 = vrot.slane %v1319, 6
    %v1336 = vsel %vm146, %v1335, %v1334
    %v1337 = vrot.slane %v1320, 5
    %v1338 = vsel %vm149, %v1337, %v1336
    %v1339 = vrot.slane %v1321, 4
    %v1340 = vsel %vm152, %v1339, %v1338
    %v1341 = vrot.slane %v1322, 3
    %v1342 = vsel %vm155, %v1341, %v1340
    %v1343 = vrot.slane %v1323, 2
    %v1344 = vsel %vm158, %v1343, %v1342
    %v1345 = vrot.slane %v1324, 1
    %v1346 = vsel %vm161, %v1345, %v1344
    %v1348 = vadd.f32 %v1250, %v1346
    %v1349 = vpack.c.bf16 %v1348, %v1348
    %1350 = vmatprep.subr.bf16.mxu0 %v262
    %1351 = vmatpush1.bf16.msra.mxu0 %v261
    %1352 = vmatprep.subr.bf16.mxu0 %v266
    %1353 = vmatpush1.bf16.msra.mxu0 %v265
    %1354 = vmatprep.subr.bf16.mxu0 %v270
    %1355 = vmatpush1.bf16.msra.mxu0 %v269
    %1356 = vmatprep.subr.bf16.mxu0 %v274
    %1357 = vmatpush1.bf16.msra.mxu0 %v273
    %1358 = vmatprep.subr.bf16.mxu0 %v278
    %1359 = vmatpush1.bf16.msra.mxu0 %v277
    %1360 = vmatprep.subr.bf16.mxu0 %v282
    %1361 = vmatpush1.bf16.msra.mxu0 %v281
    %1362 = vmatprep.subr.bf16.mxu0 %v286
    %1363 = vmatpush1.bf16.msra.mxu0 %v285
    %1364 = vmatprep.subr.bf16.mxu0 %v290
    %1365 = vmatpush1.bf16.msra.mxu0 %v289
    %1366 = vmatprep.subr.bf16.mxu0 0
    %1367 = vmatpush1.bf16.msra.mxu0 0
    %1368 = vmatprep.subr.bf16.mxu0 0
    %1369 = vmatpush1.bf16.msra.mxu0 0
    %1370 = vmatprep.subr.bf16.mxu0 0
    %1371 = vmatpush1.bf16.msra.mxu0 0
    %1372 = vmatprep.subr.bf16.mxu0 0
    %1373 = vmatpush1.bf16.msra.mxu0 0
    %1374 = vmatprep.subr.bf16.mxu0 0
    %1375 = vmatpush1.bf16.msra.mxu0 0
    %1376 = vmatprep.subr.bf16.mxu0 0
    %1377 = vmatpush1.bf16.msra.mxu0 0
    %1378 = vmatprep.subr.bf16.mxu0 0
    %1379 = vmatpush1.bf16.msra.mxu0 0
    %1380 = vmatprep.subr.bf16.mxu0 0
    %1381 = vmatpush1.bf16.msra.mxu0 0
    %1382 = vmatprep.mubr.bf16.mxu0 0
    %1383 = vmatmul.mubr.bf16.gmra.mrb[0].mxu0 %v1349
    %v1384 = vpop.f32.mrb[0].mxu0
    %v1385 = vadd.f32 %v109, %v1384
    %v1386 = vpop.f32.mrb[0].mxu0
    %v1387 = vadd.f32 %v113, %v1386
    %v1388 = vpop.f32.mrb[0].mxu0
    %v1389 = vpop.f32.mrb[0].mxu0
    %1390 = vdwg.mxu0
    %1391 = vmatprep.subr.bf16.mxu0 %v264
    %1392 = vmatpush1.bf16.msra.mxu0 %v263
    %1393 = vmatprep.subr.bf16.mxu0 %v268
    %1394 = vmatpush1.bf16.msra.mxu0 %v267
    %1395 = vmatprep.subr.bf16.mxu0 %v272
    %1396 = vmatpush1.bf16.msra.mxu0 %v271
    %1397 = vmatprep.subr.bf16.mxu0 %v276
    %1398 = vmatpush1.bf16.msra.mxu0 %v275
    %1399 = vmatprep.subr.bf16.mxu0 %v280
    %1400 = vmatpush1.bf16.msra.mxu0 %v279
    %1401 = vmatprep.subr.bf16.mxu0 %v284
    %1402 = vmatpush1.bf16.msra.mxu0 %v283
    %1403 = vmatprep.subr.bf16.mxu0 %v288
    %1404 = vmatpush1.bf16.msra.mxu0 %v287
    %1405 = vmatprep.subr.bf16.mxu0 %v292
    %1406 = vmatpush1.bf16.msra.mxu0 %v291
    %1407 = vmatprep.subr.bf16.mxu0 0
    %1408 = vmatpush1.bf16.msra.mxu0 0
    %1409 = vmatprep.subr.bf16.mxu0 0
    %1410 = vmatpush1.bf16.msra.mxu0 0
    %1411 = vmatprep.subr.bf16.mxu0 0
    %1412 = vmatpush1.bf16.msra.mxu0 0
    %1413 = vmatprep.subr.bf16.mxu0 0
    %1414 = vmatpush1.bf16.msra.mxu0 0
    %1415 = vmatprep.subr.bf16.mxu0 0
    %1416 = vmatpush1.bf16.msra.mxu0 0
    %1417 = vmatprep.subr.bf16.mxu0 0
    %1418 = vmatpush1.bf16.msra.mxu0 0
    %1419 = vmatprep.subr.bf16.mxu0 0
    %1420 = vmatpush1.bf16.msra.mxu0 0
    %1421 = vmatprep.subr.bf16.mxu0 0
    %1422 = vmatpush1.bf16.msra.mxu0 0
    %1423 = vmatprep.mubr.bf16.mxu0 0
    %1424 = vmatmul.mubr.bf16.gmra.mrb[0].mxu0 %v1349
    %v1425 = vpop.f32.mrb[0].mxu0
    %v1426 = vadd.f32 %v117, %v1425
    %v1427 = vpop.f32.mrb[0].mxu0
    %v1428 = vadd.f32 %v121, %v1427
    %v1429 = vpop.f32.mrb[0].mxu0
    %v1430 = vpop.f32.mrb[0].mxu0
    %1431 = vdwg.mxu0
    %v1432 = vxor.u32 %v1385, 2147483648
    %v1433 = vxor.u32 %v1387, 2147483648
    %v1434 = vxor.u32 %v1426, 2147483648
    %v1435 = vmul.f32 %v1432, 1.442695
    %v1436 = vpow.pop %v1435
    %v1437 = vmul.f32 %v1433, 1.442695
    %v1438 = vpow.pop %v1437
    %v1439 = vmul.f32 %v1434, 1.442695
    %v1440 = vpow.pop %v1439
    %v1441 = vadd.f32 %v1436, 1.0
    %v1442 = vadd.f32 %v1438, 1.0
    %v1443 = vadd.f32 %v1440, 1.0
    %v1444 = vrcp.pop %v1441
    %v1445 = vmul.f32 1.0, %v1444
    %v1446 = vrcp.pop %v1442
    %v1447 = vmul.f32 1.0, %v1446
    %v1448 = vrcp.pop %v1443
    %v1449 = vmul.f32 1.0, %v1448
    %v1450 = vtanh.pop %v1428
    %v1451 = vmul.f32 %v1248, %v1445
    %v1452 = vmul.f32 %v1447, %v1450
    %v1453 = vadd.f32 %v1451, %v1452
    %v1454 = vtanh.pop %v1453
    %v1455 = vmul.f32 %v1449, %v1454
    %v1457 = vcombine.high %v1455, %v1455
    %v1459 = vunpack.c.l.s4 1966171168
    %v1460 = vunpack.c.0.s8 %v1459
    %v1461 = vlaneseq
    %v1462 = vshrl.u32 %v1461, 7
    %v1463 = vsub.s32 %v1460, %v1462
    %v1464 = vrot.slane %v1455, %v1463
    %v1466 = vunpack.c.l.s4 1966171168
    %v1467 = vunpack.c.0.s8 %v1466
    %v1468 = vlaneseq
    %v1469 = vshrl.u32 %v1468, 7
    %v1470 = vsub.s32 %v1467, %v1469
    %v1471 = vrot.slane %v1457, %v1470
    %v1472 = vcombine.high %v1464, %v1464
    %v1473 = vcombine.high %v1471, %v1471
    %v1475 = vunpack.c.l.s4 1966171168
    %v1476 = vunpack.c.0.s8 %v1475
    %v1477 = vlaneseq
    %v1478 = vshrl.u32 %v1477, 7
    %v1479 = vsub.s32 %v1476, %v1478
    %v1480 = vrot.slane %v1464, %v1479
    %v1482 = vunpack.c.l.s4 1966171168
    %v1483 = vunpack.c.0.s8 %v1482
    %v1484 = vlaneseq
    %v1485 = vshrl.u32 %v1484, 7
    %v1486 = vsub.s32 %v1483, %v1485
    %v1487 = vrot.slane %v1471, %v1486
    %v1489 = vunpack.c.l.s4 1966171168
    %v1490 = vunpack.c.0.s8 %v1489
    %v1491 = vlaneseq
    %v1492 = vshrl.u32 %v1491, 7
    %v1493 = vsub.s32 %v1490, %v1492
    %v1494 = vrot.slane %v1472, %v1493
    %v1496 = vunpack.c.l.s4 1966171168
    %v1497 = vunpack.c.0.s8 %v1496
    %v1498 = vlaneseq
    %v1499 = vshrl.u32 %v1498, 7
    %v1500 = vsub.s32 %v1497, %v1499
    %v1501 = vrot.slane %v1473, %v1500
    %v1502 = vcombine.high %v1480, %v1480
    %v1503 = vcombine.high %v1487, %v1487
    %v1504 = vcombine.high %v1494, %v1494
    %v1505 = vcombine.high %v1501, %v1501
    %1514 = vst [vmem:[#allocation7 + $0x5] sm:$0x1] %v1480
    %1515 = vst [vmem:[#allocation7 + $0xd] sm:$0x1] %v1494
    %1516 = vst [vmem:[#allocation7 + $0x15] sm:$0x1] %v1502
    %1517 = vst [vmem:[#allocation7 + $0x1d] sm:$0x1] %v1504
    %1518 = vst [vmem:[#allocation7 + $0x25] sm:$0x1] %v1487
    %1519 = vst [vmem:[#allocation7 + $0x2d] sm:$0x1] %v1501
    %1520 = vst [vmem:[#allocation7 + $0x35] sm:$0x1] %v1503
    %1521 = vst [vmem:[#allocation7 + $0x3d] sm:$0x1] %v1505
    %v1522 = vld [vmem:[#allocation2 + $0x6] sm:$0x1]
    %v1523 = vld [vmem:[#allocation2 + $0xe] sm:$0x1]
    %v1524 = vld [vmem:[#allocation2 + $0x16] sm:$0x1]
    %v1525 = vld [vmem:[#allocation2 + $0x1e] sm:$0x1]
    %v1526 = vld [vmem:[#allocation2 + $0x26] sm:$0x1]
    %v1527 = vld [vmem:[#allocation2 + $0x2e] sm:$0x1]
    %v1528 = vld [vmem:[#allocation2 + $0x36] sm:$0x1]
    %v1529 = vld [vmem:[#allocation2 + $0x3e] sm:$0x1]
    %v1538 = vrot.slane %v1523, 7
    %v1539 = vsel %vm143, %v1538, %v1522
    %v1540 = vrot.slane %v1524, 6
    %v1541 = vsel %vm146, %v1540, %v1539
    %v1542 = vrot.slane %v1525, 5
    %v1543 = vsel %vm149, %v1542, %v1541
    %v1544 = vrot.slane %v1526, 4
    %v1545 = vsel %vm152, %v1544, %v1543
    %v1546 = vrot.slane %v1527, 3
    %v1547 = vsel %vm155, %v1546, %v1545
    %v1548 = vrot.slane %v1528, 2
    %v1549 = vsel %vm158, %v1548, %v1547
    %v1550 = vrot.slane %v1529, 1
    %v1551 = vsel %vm161, %v1550, %v1549
    %v1553 = vadd.f32 %v1455, %v1551
    %v1554 = vpack.c.bf16 %v1553, %v1553
    %1555 = vmatprep.subr.bf16.mxu0 %v262
    %1556 = vmatpush1.bf16.msra.mxu0 %v261
    %1557 = vmatprep.subr.bf16.mxu0 %v266
    %1558 = vmatpush1.bf16.msra.mxu0 %v265
    %1559 = vmatprep.subr.bf16.mxu0 %v270
    %1560 = vmatpush1.bf16.msra.mxu0 %v269
    %1561 = vmatprep.subr.bf16.mxu0 %v274
    %1562 = vmatpush1.bf16.msra.mxu0 %v273
    %1563 = vmatprep.subr.bf16.mxu0 %v278
    %1564 = vmatpush1.bf16.msra.mxu0 %v277
    %1565 = vmatprep.subr.bf16.mxu0 %v282
    %1566 = vmatpush1.bf16.msra.mxu0 %v281
    %1567 = vmatprep.subr.bf16.mxu0 %v286
    %1568 = vmatpush1.bf16.msra.mxu0 %v285
    %1569 = vmatprep.subr.bf16.mxu0 %v290
    %1570 = vmatpush1.bf16.msra.mxu0 %v289
    %1571 = vmatprep.subr.bf16.mxu0 0
    %1572 = vmatpush1.bf16.msra.mxu0 0
    %1573 = vmatprep.subr.bf16.mxu0 0
    %1574 = vmatpush1.bf16.msra.mxu0 0
    %1575 = vmatprep.subr.bf16.mxu0 0
    %1576 = vmatpush1.bf16.msra.mxu0 0
    %1577 = vmatprep.subr.bf16.mxu0 0
    %1578 = vmatpush1.bf16.msra.mxu0 0
    %1579 = vmatprep.subr.bf16.mxu0 0
    %1580 = vmatpush1.bf16.msra.mxu0 0
    %1581 = vmatprep.subr.bf16.mxu0 0
    %1582 = vmatpush1.bf16.msra.mxu0 0
    %1583 = vmatprep.subr.bf16.mxu0 0
    %1584 = vmatpush1.bf16.msra.mxu0 0
    %1585 = vmatprep.subr.bf16.mxu0 0
    %1586 = vmatpush1.bf16.msra.mxu0 0
    %1587 = vmatprep.mubr.bf16.mxu0 0
    %1588 = vmatmul.mubr.bf16.gmra.mrb[0].mxu0 %v1554
    %v1589 = vpop.f32.mrb[0].mxu0
    %v1590 = vadd.f32 %v109, %v1589
    %v1591 = vpop.f32.mrb[0].mxu0
    %v1592 = vadd.f32 %v113, %v1591
    %v1593 = vpop.f32.mrb[0].mxu0
    %v1594 = vpop.f32.mrb[0].mxu0
    %1595 = vdwg.mxu0
    %1596 = vmatprep.subr.bf16.mxu0 %v264
    %1597 = vmatpush1.bf16.msra.mxu0 %v263
    %1598 = vmatprep.subr.bf16.mxu0 %v268
    %1599 = vmatpush1.bf16.msra.mxu0 %v267
    %1600 = vmatprep.subr.bf16.mxu0 %v272
    %1601 = vmatpush1.bf16.msra.mxu0 %v271
    %1602 = vmatprep.subr.bf16.mxu0 %v276
    %1603 = vmatpush1.bf16.msra.mxu0 %v275
    %1604 = vmatprep.subr.bf16.mxu0 %v280
    %1605 = vmatpush1.bf16.msra.mxu0 %v279
    %1606 = vmatprep.subr.bf16.mxu0 %v284
    %1607 = vmatpush1.bf16.msra.mxu0 %v283
    %1608 = vmatprep.subr.bf16.mxu0 %v288
    %1609 = vmatpush1.bf16.msra.mxu0 %v287
    %1610 = vmatprep.subr.bf16.mxu0 %v292
    %1611 = vmatpush1.bf16.msra.mxu0 %v291
    %1612 = vmatprep.subr.bf16.mxu0 0
    %1613 = vmatpush1.bf16.msra.mxu0 0
    %1614 = vmatprep.subr.bf16.mxu0 0
    %1615 = vmatpush1.bf16.msra.mxu0 0
    %1616 = vmatprep.subr.bf16.mxu0 0
    %1617 = vmatpush1.bf16.msra.mxu0 0
    %1618 = vmatprep.subr.bf16.mxu0 0
    %1619 = vmatpush1.bf16.msra.mxu0 0
    %1620 = vmatprep.subr.bf16.mxu0 0
    %1621 = vmatpush1.bf16.msra.mxu0 0
    %1622 = vmatprep.subr.bf16.mxu0 0
    %1623 = vmatpush1.bf16.msra.mxu0 0
    %1624 = vmatprep.subr.bf16.mxu0 0
    %1625 = vmatpush1.bf16.msra.mxu0 0
    %1626 = vmatprep.subr.bf16.mxu0 0
    %1627 = vmatpush1.bf16.msra.mxu0 0
    %1628 = vmatprep.mubr.bf16.mxu0 0
    %1629 = vmatmul.mubr.bf16.gmra.mrb[0].mxu0 %v1554
    %v1630 = vpop.f32.mrb[0].mxu0
    %v1631 = vadd.f32 %v117, %v1630
    %v1632 = vpop.f32.mrb[0].mxu0
    %v1633 = vadd.f32 %v121, %v1632
    %v1634 = vpop.f32.mrb[0].mxu0
    %v1635 = vpop.f32.mrb[0].mxu0
    %1636 = vdwg.mxu0
    %v1637 = vxor.u32 %v1590, 2147483648
    %v1638 = vxor.u32 %v1592, 2147483648
    %v1639 = vxor.u32 %v1631, 2147483648
    %v1640 = vmul.f32 %v1637, 1.442695
    %v1641 = vpow.pop %v1640
    %v1642 = vmul.f32 %v1638, 1.442695
    %v1643 = vpow.pop %v1642
    %v1644 = vmul.f32 %v1639, 1.442695
    %v1645 = vpow.pop %v1644
    %v1646 = vadd.f32 %v1641, 1.0
    %v1647 = vadd.f32 %v1643, 1.0
    %v1648 = vadd.f32 %v1645, 1.0
    %v1649 = vrcp.pop %v1646
    %v1650 = vmul.f32 1.0, %v1649
    %v1651 = vrcp.pop %v1647
    %v1652 = vmul.f32 1.0, %v1651
    %v1653 = vrcp.pop %v1648
    %v1654 = vmul.f32 1.0, %v1653
    %v1655 = vtanh.pop %v1633
    %v1656 = vmul.f32 %v1453, %v1650
    %v1657 = vmul.f32 %v1652, %v1655
    %v1658 = vadd.f32 %v1656, %v1657
    %v1659 = vtanh.pop %v1658
    %v1660 = vmul.f32 %v1654, %v1659
    %v1662 = vcombine.high %v1660, %v1660
    %v1664 = vunpack.c.l.s4 1966171168
    %v1665 = vunpack.c.0.s8 %v1664
    %v1666 = vlaneseq
    %v1667 = vshrl.u32 %v1666, 7
    %v1668 = vsub.s32 %v1665, %v1667
    %v1669 = vrot.slane %v1660, %v1668
    %v1671 = vunpack.c.l.s4 1966171168
    %v1672 = vunpack.c.0.s8 %v1671
    %v1673 = vlaneseq
    %v1674 = vshrl.u32 %v1673, 7
    %v1675 = vsub.s32 %v1672, %v1674
    %v1676 = vrot.slane %v1662, %v1675
    %v1677 = vcombine.high %v1669, %v1669
    %v1678 = vcombine.high %v1676, %v1676
    %v1680 = vunpack.c.l.s4 1966171168
    %v1681 = vunpack.c.0.s8 %v1680
    %v1682 = vlaneseq
    %v1683 = vshrl.u32 %v1682, 7
    %v1684 = vsub.s32 %v1681, %v1683
    %v1685 = vrot.slane %v1669, %v1684
    %v1687 = vunpack.c.l.s4 1966171168
    %v1688 = vunpack.c.0.s8 %v1687
    %v1689 = vlaneseq
    %v1690 = vshrl.u32 %v1689, 7
    %v1691 = vsub.s32 %v1688, %v1690
    %v1692 = vrot.slane %v1676, %v1691
    %v1694 = vunpack.c.l.s4 1966171168
    %v1695 = vunpack.c.0.s8 %v1694
    %v1696 = vlaneseq
    %v1697 = vshrl.u32 %v1696, 7
    %v1698 = vsub.s32 %v1695, %v1697
    %v1699 = vrot.slane %v1677, %v1698
    %v1701 = vunpack.c.l.s4 1966171168
    %v1702 = vunpack.c.0.s8 %v1701
    %v1703 = vlaneseq
    %v1704 = vshrl.u32 %v1703, 7
    %v1705 = vsub.s32 %v1702, %v1704
    %v1706 = vrot.slane %v1678, %v1705
    %v1707 = vcombine.high %v1685, %v1685
    %v1708 = vcombine.high %v1692, %v1692
    %v1709 = vcombine.high %v1699, %v1699
    %v1710 = vcombine.high %v1706, %v1706
    %1719 = vst [vmem:[#allocation7 + $0x6] sm:$0x1] %v1685
    %1720 = vst [vmem:[#allocation7 + $0xe] sm:$0x1] %v1699
    %1721 = vst [vmem:[#allocation7 + $0x16] sm:$0x1] %v1707
    %1722 = vst [vmem:[#allocation7 + $0x1e] sm:$0x1] %v1709
    %1723 = vst [vmem:[#allocation7 + $0x26] sm:$0x1] %v1692
    %1724 = vst [vmem:[#allocation7 + $0x2e] sm:$0x1] %v1706
    %1725 = vst [vmem:[#allocation7 + $0x36] sm:$0x1] %v1708
    %1726 = vst [vmem:[#allocation7 + $0x3e] sm:$0x1] %v1710
    %v1727 = vld [vmem:[#allocation2 + $0x7] sm:$0x1]
    %v1728 = vld [vmem:[#allocation2 + $0xf] sm:$0x1]
    %v1729 = vld [vmem:[#allocation2 + $0x17] sm:$0x1]
    %v1730 = vld [vmem:[#allocation2 + $0x1f] sm:$0x1]
    %v1731 = vld [vmem:[#allocation2 + $0x27] sm:$0x1]
    %v1732 = vld [vmem:[#allocation2 + $0x2f] sm:$0x1]
    %v1733 = vld [vmem:[#allocation2 + $0x37] sm:$0x1]
    %v1734 = vld [vmem:[#allocation2 + $0x3f] sm:$0x1]
    %v1743 = vrot.slane %v1728, 7
    %v1744 = vsel %vm143, %v1743, %v1727
    %v1745 = vrot.slane %v1729, 6
    %v1746 = vsel %vm146, %v1745, %v1744
    %v1747 = vrot.slane %v1730, 5
    %v1748 = vsel %vm149, %v1747, %v1746
    %v1749 = vrot.slane %v1731, 4
    %v1750 = vsel %vm152, %v1749, %v1748
    %v1751 = vrot.slane %v1732, 3
    %v1752 = vsel %vm155, %v1751, %v1750
    %v1753 = vrot.slane %v1733, 2
    %v1754 = vsel %vm158, %v1753, %v1752
    %v1755 = vrot.slane %v1734, 1
    %v1756 = vsel %vm161, %v1755, %v1754
    %v1758 = vadd.f32 %v1660, %v1756
    %v1759 = vpack.c.bf16 %v1758, %v1758
    %1760 = vmatprep.subr.bf16.mxu0 %v262
    %1761 = vmatpush1.bf16.msra.mxu0 %v261
    %1762 = vmatprep.subr.bf16.mxu0 %v266
    %1763 = vmatpush1.bf16.msra.mxu0 %v265
    %1764 = vmatprep.subr.bf16.mxu0 %v270
    %1765 = vmatpush1.bf16.msra.mxu0 %v269
    %1766 = vmatprep.subr.bf16.mxu0 %v274
    %1767 = vmatpush1.bf16.msra.mxu0 %v273
    %1768 = vmatprep.subr.bf16.mxu0 %v278
    %1769 = vmatpush1.bf16.msra.mxu0 %v277
    %1770 = vmatprep.subr.bf16.mxu0 %v282
    %1771 = vmatpush1.bf16.msra.mxu0 %v281
    %1772 = vmatprep.subr.bf16.mxu0 %v286
    %1773 = vmatpush1.bf16.msra.mxu0 %v285
    %1774 = vmatprep.subr.bf16.mxu0 %v290
    %1775 = vmatpush1.bf16.msra.mxu0 %v289
    %1776 = vmatprep.subr.bf16.mxu0 0
    %1777 = vmatpush1.bf16.msra.mxu0 0
    %1778 = vmatprep.subr.bf16.mxu0 0
    %1779 = vmatpush1.bf16.msra.mxu0 0
    %1780 = vmatprep.subr.bf16.mxu0 0
    %1781 = vmatpush1.bf16.msra.mxu0 0
    %1782 = vmatprep.subr.bf16.mxu0 0
    %1783 = vmatpush1.bf16.msra.mxu0 0
    %1784 = vmatprep.subr.bf16.mxu0 0
    %1785 = vmatpush1.bf16.msra.mxu0 0
    %1786 = vmatprep.subr.bf16.mxu0 0
    %1787 = vmatpush1.bf16.msra.mxu0 0
    %1788 = vmatprep.subr.bf16.mxu0 0
    %1789 = vmatpush1.bf16.msra.mxu0 0
    %1790 = vmatprep.subr.bf16.mxu0 0
    %1791 = vmatpush1.bf16.msra.mxu0 0
    %1792 = vmatprep.mubr.bf16.mxu0 0
    %1793 = vmatmul.mubr.bf16.gmra.mrb[0].mxu0 %v1759
    %v1794 = vpop.f32.mrb[0].mxu0
    %v1795 = vadd.f32 %v109, %v1794
    %v1796 = vpop.f32.mrb[0].mxu0
    %v1797 = vadd.f32 %v113, %v1796
    %v1798 = vpop.f32.mrb[0].mxu0
    %v1799 = vpop.f32.mrb[0].mxu0
    %1800 = vdwg.mxu0
    %1801 = vmatprep.subr.bf16.mxu0 %v264
    %1802 = vmatpush1.bf16.msra.mxu0 %v263
    %1803 = vmatprep.subr.bf16.mxu0 %v268
    %1804 = vmatpush1.bf16.msra.mxu0 %v267
    %1805 = vmatprep.subr.bf16.mxu0 %v272
    %1806 = vmatpush1.bf16.msra.mxu0 %v271
    %1807 = vmatprep.subr.bf16.mxu0 %v276
    %1808 = vmatpush1.bf16.msra.mxu0 %v275
    %1809 = vmatprep.subr.bf16.mxu0 %v280
    %1810 = vmatpush1.bf16.msra.mxu0 %v279
    %1811 = vmatprep.subr.bf16.mxu0 %v284
    %1812 = vmatpush1.bf16.msra.mxu0 %v283
    %1813 = vmatprep.subr.bf16.mxu0 %v288
    %1814 = vmatpush1.bf16.msra.mxu0 %v287
    %1815 = vmatprep.subr.bf16.mxu0 %v292
    %1816 = vmatpush1.bf16.msra.mxu0 %v291
    %1817 = vmatprep.subr.bf16.mxu0 0
    %1818 = vmatpush1.bf16.msra.mxu0 0
    %1819 = vmatprep.subr.bf16.mxu0 0
    %1820 = vmatpush1.bf16.msra.mxu0 0
    %1821 = vmatprep.subr.bf16.mxu0 0
    %1822 = vmatpush1.bf16.msra.mxu0 0
    %1823 = vmatprep.subr.bf16.mxu0 0
    %1824 = vmatpush1.bf16.msra.mxu0 0
    %1825 = vmatprep.subr.bf16.mxu0 0
    %1826 = vmatpush1.bf16.msra.mxu0 0
    %1827 = vmatprep.subr.bf16.mxu0 0
    %1828 = vmatpush1.bf16.msra.mxu0 0
    %1829 = vmatprep.subr.bf16.mxu0 0
    %1830 = vmatpush1.bf16.msra.mxu0 0
    %1831 = vmatprep.subr.bf16.mxu0 0
    %1832 = vmatpush1.bf16.msra.mxu0 0
    %1833 = vmatprep.mubr.bf16.mxu0 0
    %1834 = vmatmul.mubr.bf16.gmra.mrb[0].mxu0 %v1759
    %v1835 = vpop.f32.mrb[0].mxu0
    %v1836 = vadd.f32 %v117, %v1835
    %v1837 = vpop.f32.mrb[0].mxu0
    %v1838 = vadd.f32 %v121, %v1837
    %v1839 = vpop.f32.mrb[0].mxu0
    %v1840 = vpop.f32.mrb[0].mxu0
    %1841 = vdwg.mxu0
    %v1842 = vxor.u32 %v1795, 2147483648
    %v1843 = vxor.u32 %v1797, 2147483648
    %v1844 = vxor.u32 %v1836, 2147483648
    %v1845 = vmul.f32 %v1842, 1.442695
    %v1846 = vpow.pop %v1845
    %v1847 = vmul.f32 %v1843, 1.442695
    %v1848 = vpow.pop %v1847
    %v1849 = vmul.f32 %v1844, 1.442695
    %v1850 = vpow.pop %v1849
    %v1851 = vadd.f32 %v1846, 1.0
    %v1852 = vadd.f32 %v1848, 1.0
    %v1853 = vadd.f32 %v1850, 1.0
    %v1854 = vrcp.pop %v1851
    %v1855 = vmul.f32 1.0, %v1854
    %v1856 = vrcp.pop %v1852
    %v1857 = vmul.f32 1.0, %v1856
    %v1858 = vrcp.pop %v1853
    %v1859 = vmul.f32 1.0, %v1858
    %v1860 = vtanh.pop %v1838
    %v1861 = vmul.f32 %v1658, %v1855
    %v1862 = vmul.f32 %v1857, %v1860
    %v1863 = vadd.f32 %v1861, %v1862
    %v1864 = vtanh.pop %v1863
    %v1865 = vmul.f32 %v1859, %v1864
    %v1867 = vcombine.high %v1865, %v1865
    %v1869 = vunpack.c.l.s4 1966171168
    %v1870 = vunpack.c.0.s8 %v1869
    %v1871 = vlaneseq
    %v1872 = vshrl.u32 %v1871, 7
    %v1873 = vsub.s32 %v1870, %v1872
    %v1874 = vrot.slane %v1865, %v1873
    %v1876 = vunpack.c.l.s4 1966171168
    %v1877 = vunpack.c.0.s8 %v1876
    %v1878 = vlaneseq
    %v1879 = vshrl.u32 %v1878, 7
    %v1880 = vsub.s32 %v1877, %v1879
    %v1881 = vrot.slane %v1867, %v1880
    %v1882 = vcombine.high %v1874, %v1874
    %v1883 = vcombine.high %v1881, %v1881
    %v1885 = vunpack.c.l.s4 1966171168
    %v1886 = vunpack.c.0.s8 %v1885
    %v1887 = vlaneseq
    %v1888 = vshrl.u32 %v1887, 7
    %v1889 = vsub.s32 %v1886, %v1888
    %v1890 = vrot.slane %v1874, %v1889
    %v1892 = vunpack.c.l.s4 1966171168
    %v1893 = vunpack.c.0.s8 %v1892
    %v1894 = vlaneseq
    %v1895 = vshrl.u32 %v1894, 7
    %v1896 = vsub.s32 %v1893, %v1895
    %v1897 = vrot.slane %v1881, %v1896
    %v1899 = vunpack.c.l.s4 1966171168
    %v1900 = vunpack.c.0.s8 %v1899
    %v1901 = vlaneseq
    %v1902 = vshrl.u32 %v1901, 7
    %v1903 = vsub.s32 %v1900, %v1902
    %v1904 = vrot.slane %v1882, %v1903
    %v1906 = vunpack.c.l.s4 1966171168
    %v1907 = vunpack.c.0.s8 %v1906
    %v1908 = vlaneseq
    %v1909 = vshrl.u32 %v1908, 7
    %v1910 = vsub.s32 %v1907, %v1909
    %v1911 = vrot.slane %v1883, %v1910
    %v1912 = vcombine.high %v1890, %v1890
    %v1913 = vcombine.high %v1897, %v1897
    %v1914 = vcombine.high %v1904, %v1904
    %v1915 = vcombine.high %v1911, %v1911
    %1924 = vst [vmem:[#allocation7 + $0x7] sm:$0x1] %v1890
    %1925 = vst [vmem:[#allocation7 + $0xf] sm:$0x1] %v1904
    %1926 = vst [vmem:[#allocation7 + $0x17] sm:$0x1] %v1912
    %1927 = vst [vmem:[#allocation7 + $0x1f] sm:$0x1] %v1914
    %1928 = vst [vmem:[#allocation7 + $0x27] sm:$0x1] %v1897
    %1929 = vst [vmem:[#allocation7 + $0x2f] sm:$0x1] %v1911
    %1930 = vst [vmem:[#allocation7 + $0x37] sm:$0x1] %v1913
    %1931 = vst [vmem:[#allocation7 + $0x3f] sm:$0x1] %v1915
    %1932 = vst [vmem:[#allocation8] sm:$0xff] %v1865
    %1933 = vst [vmem:[#allocation10] sm:$0xff] %v1863
    // Predicated region
    $region22: #{my_lstm_forward.1} parent=1 // pred_check
      _
    $region23: #{my_lstm_forward.1} parent=1 // pred_check_branch
      %1935 = sbr.rel (0) target = $region25
    $region24: #{my_lstm_forward.1} parent=1 // pred_region
      %s1937 = ssub.s32 1024, 1024
      %1938 = vsyncadd [#allocation4], %s1937
      %s1939 = sshll.u32 [#allocation7], 4
      %s1940 = int_to_ptr.vmem [resolvable:$true] %s1939
      %1945 = dma.vmem_to_hbm [thread:$0]  %s1940, 1024, %s3, [#allocation4], 128, 128, 8
    $region25: #{my_lstm_forward.1} parent=1 // pred_fallthru
      _
    // Predicated region
    $region26: #{my_lstm_forward.1} parent=1 // pred_check
      _
    $region27: #{my_lstm_forward.1} parent=1 // pred_check_branch
      %1947 = sbr.rel (0) target = $region29
    $region28: #{my_lstm_forward.1} parent=1 // pred_region
      %s1949 = ssub.s32 128, 128
      %1950 = vsyncadd [#allocation9], %s1949
      %s1952 = sshll.u32 [#allocation8], 4
      %s1953 = int_to_ptr.vmem [resolvable:$true] %s1952
      %1955 = dma.vmem_to_hbm [thread:$0]  %s1953, 128, %s4, [#allocation9]
    $region29: #{my_lstm_forward.1} parent=1 // pred_fallthru
      _
    // Predicated region
    $region30: #{my_lstm_forward.1} parent=1 // pred_check
      _
    $region31: #{my_lstm_forward.1} parent=1 // pred_check_branch
      %1957 = sbr.rel (0) target = $region33
    $region32: #{my_lstm_forward.1} parent=1 // pred_region
      %s1959 = ssub.s32 128, 128
      %1960 = vsyncadd [#allocation9], %s1959
      %s1962 = sshll.u32 [#allocation10], 4
      %s1963 = int_to_ptr.vmem [resolvable:$true] %s1962
      %1965 = dma.vmem_to_hbm [thread:$0]  %s1963, 128, %s5, [#allocation9]
    $region33: #{my_lstm_forward.1} parent=1 // pred_fallthru
      _
    // Predicated region
    $region34: #{my_lstm_forward.1} parent=1 // pred_check
      _
    $region35: #{my_lstm_forward.1} parent=1 // pred_check_branch
      %1967 = sbr.rel (0) target = $region37
    $region36: #{my_lstm_forward.1} parent=1 // pred_region
      %1968 = dma.done [#allocation4], 1024
    $region37: #{my_lstm_forward.1} parent=1 // pred_fallthru
      _
    // Predicated region
    $region38: #{my_lstm_forward.1} parent=1 // pred_check
      _
    $region39: #{my_lstm_forward.1} parent=1 // pred_check_branch
      %1970 = sbr.rel (0) target = $region41
    $region40: #{my_lstm_forward.1} parent=1 // pred_region
      %1971 = dma.done [#allocation9], 128
    $region41: #{my_lstm_forward.1} parent=1 // pred_fallthru
      _
    // Predicated region
    $region42: #{my_lstm_forward.1} parent=1 // pred_check
      _
    $region43: #{my_lstm_forward.1} parent=1 // pred_check_branch
      %1973 = sbr.rel (0) target = $region45
    $region44: #{my_lstm_forward.1} parent=1 // pred_region
      %1974 = dma.done [#allocation9], 128
    $region45: #{my_lstm_forward.1} parent=1 // pred_fallthru
      _
    %1975 = vsyncpa [#allocation3], 1
    %1976 = vsyncpa [#allocation6], 1
    %1977 = vsyncpa [#allocation4], 1
    %1978 = vsyncpa [#allocation9], 1

</llo_original>
